<compile_context>
chip_gen: v5e
topology: v5e:2x2
jax: 0.10.0
libtpu: 0.0.40
codegen_flags: <defaults>
</compile_context>

<pallas_src>
import functools

import jax
import jax.numpy as jnp
from jax.experimental import pallas as pl
from jax.experimental.pallas import tpu as pltpu


def _shift_rows(g, delta, D, HW):
    """out[d, :] = g[d + delta, :] if 0 <= d + delta < D else 0   (static delta)."""
    if delta == 0:
        return g
    if abs(delta) >= D:
        return jnp.zeros((D, HW), jnp.float32)
    pad = jnp.zeros((abs(delta), HW), jnp.float32)
    if delta > 0:
        return jnp.concatenate([g[delta:, :], pad], axis=0)
    return jnp.concatenate([pad, g[:D + delta, :]], axis=0)


def spatial_attention_3d_kernel(s_ref, x_ref, o_ref, *, D, HW, K, Bb):
    """One (Bb, C, D, HW) block per grid step.

    s_ref : VMEM f32[K, 2*HW, HW]  shift-weight matrix (conv weights baked in), resident
    x_ref : VMEM x.dtype[Bb, C, D, HW]
    o_ref : VMEM x.dtype[Bb, C, D, HW]
    """
    P = K // 2

    def one_batch(b, carry):
        xb = x_ref[b]
        if xb.dtype != jnp.float32:
            xb = xb.astype(jnp.float32)
        avg = jnp.mean(xb, axis=0)                       # (D, HW) channel mean
        mx = jnp.max(xb, axis=0)                         # (D, HW) channel max
        am = jnp.concatenate([avg, mx], axis=1)          # (D, 2*HW), lane-aligned

        # Zero-padded Conv3d(2,1,K) == sum over K depth taps of an MXU matmul against the
        # per-tap spatial shift-weight block, with the depth offset applied as a row shift
        # of the (ephemeral) matmul output.
        conv = jnp.zeros((D, HW), jnp.float32)
        for kd in range(K):
            g = jnp.dot(am, s_ref[kd], preferred_element_type=jnp.float32)   # (D, HW)
            conv = conv + _shift_rows(g, kd - P, D, HW)

        attn = jax.nn.sigmoid(conv)                      # (D, HW)
        # Re-read x from VMEM for the modulate (keeps live vregs independent of C).
        xm = x_ref[b]
        if xm.dtype != jnp.float32:
            xm = xm.astype(jnp.float32)
        o_ref[b] = (xm * attn[None, :, :]).astype(o_ref.dtype)
        return carry

    if Bb == 1:
        one_batch(0, 0)
    else:
        jax.lax.fori_loop(0, Bb, one_batch, 0)


def _build_shift_weight_matrix(weight, H, W, K):
    """S[kd, c*HW + h'*W + w', h*W + w] = weight[0, c, kd, h'-h+P, w'-w+P]  (0 if OOB).

    Encodes the exact zero-padded (kh, kw) cross-correlation for every (channel, kd)."""
    P = K // 2
    HW = H * W
    w_f32 = weight.astype(jnp.float32)
    kh = jnp.arange(H)[:, None] - jnp.arange(H)[None, :] + P          # (H', H)
    kw = jnp.arange(W)[:, None] - jnp.arange(W)[None, :] + P          # (W', W)
    valid = (((kh >= 0) & (kh < K))[:, None, :, None]
             & ((kw >= 0) & (kw < K))[None, :, None, :])              # (H', W', H, W)
    khc = jnp.clip(kh, 0, K - 1)
    kwc = jnp.clip(kw, 0, K - 1)

    blocks = []
    for kd in range(K):
        per_c = []
        for c in range(2):
            wsub = w_f32[0, c, kd]                                    # (K, K)
            blk = wsub[khc[:, None, :, None], kwc[None, :, None, :]]  # (H', W', H, W)
            per_c.append(jnp.where(valid, blk, 0.0).reshape(HW, HW))
        blocks.append(jnp.concatenate(per_c, axis=0))                 # (2*HW, HW)
    return jnp.stack(blocks, axis=0)                                  # (K, 2*HW, HW)


def _pick_batch_block(B, C, D, HW, itemsize):
    """Largest Bb dividing B with double-buffered in+out blocks <= ~24 MiB and at least
    min(B, 4) grid steps (megacore-friendly on v7x, v7x 64 MiB VMEM safe)."""
    budget = 24 * 1024 * 1024
    best = 1
    for bb in range(1, B + 1):
        if B % bb:
            continue
        if B // bb < min(B, 4):
            break
        if 4 * bb * C * D * HW * max(itemsize, 4) <= budget:
            best = bb
    return best


def spatial_attention_3d(x, weight, kernel_size=7, batch_block=None):
    """x: (B, C, D, H, W); weight: (1, 2, K, K, K) from Conv3d(2, 1, K, pad=K//2, bias=False)."""
    B, C, D, H, W = x.shape
    K = kernel_size
    assert weight.shape == (1, 2, K, K, K)
    HW = H * W

    s_mat = _build_shift_weight_matrix(weight, H, W, K)               # (K, 2*HW, HW) f32
    s_bytes = K * 2 * HW * HW * 4
    # TODO(synk): for H*W large enough that the shift matrix exceeds ~16 MiB, fall back to
    # a spatially tiled / VPU tap-loop variant; not needed at these sizes.
    assert s_bytes <= 16 * 1024 * 1024, "H*W too large for the single-shot MXU path"

    itemsize = x.dtype.itemsize
    Bb = batch_block if batch_block is not None else _pick_batch_block(B, C, D, HW, itemsize)
    assert B % Bb == 0, "batch_block must divide B"

    x2 = x.reshape(B, C, D, HW)   # lane-dense view (H*W multiple of 128 -> unmasked stores)

    # Explicit VMEM budget: S (x2 buffers) + double-buffered in/out blocks + in-kernel
    # f32 temporaries; capped at 64 MiB so the same config is legal on v7x.
    blk_bytes = Bb * C * D * HW * itemsize
    est = 2 * s_bytes + 4 * blk_bytes + (Bb * C * D * HW + 6 * D * HW) * 4
    vmem_limit = int(min(max(2 * est, 32 * 1024 * 1024), 64 * 1024 * 1024))

    kern = functools.partial(spatial_attention_3d_kernel, D=D, HW=HW, K=K, Bb=Bb)
    out = pl.pallas_call(
        kern,
        out_shape=jax.ShapeDtypeStruct((B, C, D, HW), x.dtype),
        grid=(B // Bb,),
        in_specs=[
            pl.BlockSpec((K, 2 * HW, HW), lambda b: (0, 0, 0)),       # S: fetched once, resident
            pl.BlockSpec((Bb, C, D, HW), lambda b: (b, 0, 0, 0)),     # x block
        ],
        out_specs=pl.BlockSpec((Bb, C, D, HW), lambda b: (b, 0, 0, 0)),
        input_output_aliases={1: 0},                                  # out reuses x's HBM buffer
        compiler_params=pltpu.CompilerParams(
            dimension_semantics=("parallel",),                        # megacore batch-parallel
            vmem_limit_bytes=vmem_limit),
    )(s_mat, x2)
    return out.reshape(B, C, D, H, W)


def ref_forward(x, weight):
    """Pure-JAX reference of the PyTorch forward pass (for verification)."""
    K = weight.shape[-1]
    P = K // 2
    avg = jnp.mean(x, axis=1, keepdims=True)
    mx = jnp.max(x, axis=1, keepdims=True)
    attn = jnp.concatenate([avg, mx], axis=1)                         # (B, 2, D, H, W)
    conv = jax.lax.conv_general_dilated(
        attn, weight,
        window_strides=(1, 1, 1),
        padding=[(P, P)] * 3,
        dimension_numbers=("NCDHW", "OIDHW", "NCDHW"),
    )                                                                 # (B, 1, D, H, W)
    return x * jax.nn.sigmoid(conv)


if __name__ == "__main__":
    # Small shapes implied by the module: (B, C, D, H, W)
    B, C, D, H, W = 2, 4, 8, 16, 16
    K = 7

    key = jax.random.PRNGKey(0)
    kx, kw = jax.random.split(key)
    x = jax.random.normal(kx, (B, C, D, H, W), dtype=jnp.float32)

    # Deterministic Conv3d(2, 1, 7, padding=3, bias=False) weight init
    # (matches PyTorch default kaiming-uniform bound 1/sqrt(fan_in)).
    fan_in = 2 * K * K * K
    bound = 1.0 / (float(fan_in) ** 0.5)
    weight = jax.random.uniform(kw, (1, 2, K, K, K), dtype=jnp.float32,
                                minval=-bound, maxval=bound)

    out = spatial_attention_3d(x, weight, kernel_size=K)
    out = jax.block_until_ready(out)
    ref = jax.block_until_ready(ref_forward(x, weight))

    assert out.shape == (B, C, D, H, W)
    max_err = float(jnp.max(jnp.abs(out - ref)))
    # MXU matmuls (kernel) and XLA conv (ref) both run at default TPU matmul precision,
    # so allow a few-milli absolute/relative slack.
    assert jnp.allclose(out, ref, atol=5e-3, rtol=5e-3), f"max abs err = {max_err}"
    print("KERNEL_OK")
</pallas_src>

<mosaic_0001>
module attributes {stable_mosaic.version = 11 : i64} {
  func.func @spatial_attention_3d_kernel(%arg0: i32, %arg1: memref<7x512x256xf32, #tpu.memory_space<vmem>>, %arg2: memref<1x4x8x256xf32, #tpu.memory_space<vmem>>, %arg3: memref<1x4x8x256xf32, #tpu.memory_space<vmem>>) attributes {dimension_semantics = [#tpu.dimension_semantics<parallel>], iteration_bounds = array<i64: 2>, scalar_prefetch = 0 : i64, scratch_operands = 0 : i64, tpu.core_type = #tpu.core_type<tc>, window_params = [{pipeline_mode = #tpu.pipeline_mode<synchronous>, transform_indices = @transform_0, window_bounds = array<i64: 7, 512, 256>}, {transform_indices = @transform_1, window_bounds = array<i64: 1, 4, 8, 256>}, {transform_indices = @transform_2, window_bounds = array<i64: 1, 4, 8, 256>}]} {
    %c0 = arith.constant 0 : index
    %c0_0 = arith.constant 0 : index
    %c0_1 = arith.constant 0 : index
    %c0_2 = arith.constant 0 : index
    %0 = vector.load %arg2[%c0, %c0_0, %c0_1, %c0_2] : memref<1x4x8x256xf32, #tpu.memory_space<vmem>>, vector<1x4x8x256xf32>
    %1 = vector.shape_cast %0 : vector<1x4x8x256xf32> to vector<4x8x256xf32>
    %cst = arith.constant dense<0.000000e+00> : vector<8x256xf32>
    %2 = vector.multi_reduction <add>, %1, %cst [0] : vector<4x8x256xf32> to vector<8x256xf32>
    %cst_3 = arith.constant 4.000000e+00 : f32
    %3 = vector.broadcast %cst_3 : f32 to vector<8x256xf32>
    %4 = arith.divf %2, %3 : vector<8x256xf32>
    %cst_4 = arith.constant dense<0xFF800000> : vector<8x256xf32>
    %5 = vector.multi_reduction <maximumf>, %1, %cst_4 [0] : vector<4x8x256xf32> to vector<8x256xf32>
    %6 = tpu.concatenate %4, %5 in 1 : vector<8x256xf32>, vector<8x256xf32> -> vector<8x512xf32>
    %cst_5 = arith.constant 0.000000e+00 : f32
    %7 = vector.broadcast %cst_5 : f32 to vector<8x256xf32>
    %c0_6 = arith.constant 0 : index
    %c0_7 = arith.constant 0 : index
    %c0_8 = arith.constant 0 : index
    %8 = vector.load %arg1[%c0_6, %c0_7, %c0_8] : memref<7x512x256xf32, #tpu.memory_space<vmem>>, vector<1x512x256xf32>
    %9 = vector.shape_cast %8 : vector<1x512x256xf32> to vector<512x256xf32>
    %cst_9 = arith.constant dense<0.000000e+00> : vector<8x256xf32>
    %10 = tpu.matmul %6, %9, %cst_9 {dimension_numbers = #tpu.dot_dimension_numbers<[1], [0], [0], [1], [0, 0, 1, 1], [], []>} : vector<8x512xf32>, vector<512x256xf32>, vector<8x256xf32> -> vector<8x256xf32>
    %cst_10 = arith.constant 0.000000e+00 : f32
    %11 = vector.broadcast %cst_10 : f32 to vector<3x256xf32>
    %12 = vector.extract_strided_slice %10 {offsets = [0, 0], sizes = [5, 256], strides = [1, 1]} : vector<8x256xf32> to vector<5x256xf32>
    %13 = tpu.concatenate %11, %12 in 0 : vector<3x256xf32>, vector<5x256xf32> -> vector<8x256xf32>
    %14 = arith.addf %7, %13 : vector<8x256xf32>
    %c1 = arith.constant 1 : index
    %c0_11 = arith.constant 0 : index
    %c0_12 = arith.constant 0 : index
    %15 = vector.load %arg1[%c1, %c0_11, %c0_12] : memref<7x512x256xf32, #tpu.memory_space<vmem>>, vector<1x512x256xf32>
    %16 = vector.shape_cast %15 : vector<1x512x256xf32> to vector<512x256xf32>
    %cst_13 = arith.constant dense<0.000000e+00> : vector<8x256xf32>
    %17 = tpu.matmul %6, %16, %cst_13 {dimension_numbers = #tpu.dot_dimension_numbers<[1], [0], [0], [1], [0, 0, 1, 1], [], []>} : vector<8x512xf32>, vector<512x256xf32>, vector<8x256xf32> -> vector<8x256xf32>
    %cst_14 = arith.constant 0.000000e+00 : f32
    %18 = vector.broadcast %cst_14 : f32 to vector<2x256xf32>
    %19 = vector.extract_strided_slice %17 {offsets = [0, 0], sizes = [6, 256], strides = [1, 1]} : vector<8x256xf32> to vector<6x256xf32>
    %20 = tpu.concatenate %18, %19 in 0 : vector<2x256xf32>, vector<6x256xf32> -> vector<8x256xf32>
    %21 = arith.addf %14, %20 : vector<8x256xf32>
    %c2 = arith.constant 2 : index
    %c0_15 = arith.constant 0 : index
    %c0_16 = arith.constant 0 : index
    %22 = vector.load %arg1[%c2, %c0_15, %c0_16] : memref<7x512x256xf32, #tpu.memory_space<vmem>>, vector<1x512x256xf32>
    %23 = vector.shape_cast %22 : vector<1x512x256xf32> to vector<512x256xf32>
    %cst_17 = arith.constant dense<0.000000e+00> : vector<8x256xf32>
    %24 = tpu.matmul %6, %23, %cst_17 {dimension_numbers = #tpu.dot_dimension_numbers<[1], [0], [0], [1], [0, 0, 1, 1], [], []>} : vector<8x512xf32>, vector<512x256xf32>, vector<8x256xf32> -> vector<8x256xf32>
    %cst_18 = arith.constant 0.000000e+00 : f32
    %25 = vector.broadcast %cst_18 : f32 to vector<1x256xf32>
    %26 = vector.extract_strided_slice %24 {offsets = [0, 0], sizes = [7, 256], strides = [1, 1]} : vector<8x256xf32> to vector<7x256xf32>
    %27 = tpu.concatenate %25, %26 in 0 : vector<1x256xf32>, vector<7x256xf32> -> vector<8x256xf32>
    %28 = arith.addf %21, %27 : vector<8x256xf32>
    %c3 = arith.constant 3 : index
    %c0_19 = arith.constant 0 : index
    %c0_20 = arith.constant 0 : index
    %29 = vector.load %arg1[%c3, %c0_19, %c0_20] : memref<7x512x256xf32, #tpu.memory_space<vmem>>, vector<1x512x256xf32>
    %30 = vector.shape_cast %29 : vector<1x512x256xf32> to vector<512x256xf32>
    %cst_21 = arith.constant dense<0.000000e+00> : vector<8x256xf32>
    %31 = tpu.matmul %6, %30, %cst_21 {dimension_numbers = #tpu.dot_dimension_numbers<[1], [0], [0], [1], [0, 0, 1, 1], [], []>} : vector<8x512xf32>, vector<512x256xf32>, vector<8x256xf32> -> vector<8x256xf32>
    %32 = arith.addf %28, %31 : vector<8x256xf32>
    %c4 = arith.constant 4 : index
    %c0_22 = arith.constant 0 : index
    %c0_23 = arith.constant 0 : index
    %33 = vector.load %arg1[%c4, %c0_22, %c0_23] : memref<7x512x256xf32, #tpu.memory_space<vmem>>, vector<1x512x256xf32>
    %34 = vector.shape_cast %33 : vector<1x512x256xf32> to vector<512x256xf32>
    %cst_24 = arith.constant dense<0.000000e+00> : vector<8x256xf32>
    %35 = tpu.matmul %6, %34, %cst_24 {dimension_numbers = #tpu.dot_dimension_numbers<[1], [0], [0], [1], [0, 0, 1, 1], [], []>} : vector<8x512xf32>, vector<512x256xf32>, vector<8x256xf32> -> vector<8x256xf32>
    %cst_25 = arith.constant 0.000000e+00 : f32
    %36 = vector.broadcast %cst_25 : f32 to vector<1x256xf32>
    %37 = vector.extract_strided_slice %35 {offsets = [1, 0], sizes = [7, 256], strides = [1, 1]} : vector<8x256xf32> to vector<7x256xf32>
    %38 = tpu.concatenate %37, %36 in 0 : vector<7x256xf32>, vector<1x256xf32> -> vector<8x256xf32>
    %39 = arith.addf %32, %38 : vector<8x256xf32>
    %c5 = arith.constant 5 : index
    %c0_26 = arith.constant 0 : index
    %c0_27 = arith.constant 0 : index
    %40 = vector.load %arg1[%c5, %c0_26, %c0_27] : memref<7x512x256xf32, #tpu.memory_space<vmem>>, vector<1x512x256xf32>
    %41 = vector.shape_cast %40 : vector<1x512x256xf32> to vector<512x256xf32>
    %cst_28 = arith.constant dense<0.000000e+00> : vector<8x256xf32>
    %42 = tpu.matmul %6, %41, %cst_28 {dimension_numbers = #tpu.dot_dimension_numbers<[1], [0], [0], [1], [0, 0, 1, 1], [], []>} : vector<8x512xf32>, vector<512x256xf32>, vector<8x256xf32> -> vector<8x256xf32>
    %cst_29 = arith.constant 0.000000e+00 : f32
    %43 = vector.broadcast %cst_29 : f32 to vector<2x256xf32>
    %44 = vector.extract_strided_slice %42 {offsets = [2, 0], sizes = [6, 256], strides = [1, 1]} : vector<8x256xf32> to vector<6x256xf32>
    %45 = tpu.concatenate %44, %43 in 0 : vector<6x256xf32>, vector<2x256xf32> -> vector<8x256xf32>
    %46 = arith.addf %39, %45 : vector<8x256xf32>
    %c6 = arith.constant 6 : index
    %c0_30 = arith.constant 0 : index
    %c0_31 = arith.constant 0 : index
    %47 = vector.load %arg1[%c6, %c0_30, %c0_31] : memref<7x512x256xf32, #tpu.memory_space<vmem>>, vector<1x512x256xf32>
    %48 = vector.shape_cast %47 : vector<1x512x256xf32> to vector<512x256xf32>
    %cst_32 = arith.constant dense<0.000000e+00> : vector<8x256xf32>
    %49 = tpu.matmul %6, %48, %cst_32 {dimension_numbers = #tpu.dot_dimension_numbers<[1], [0], [0], [1], [0, 0, 1, 1], [], []>} : vector<8x512xf32>, vector<512x256xf32>, vector<8x256xf32> -> vector<8x256xf32>
    %cst_33 = arith.constant 0.000000e+00 : f32
    %50 = vector.broadcast %cst_33 : f32 to vector<3x256xf32>
    %51 = vector.extract_strided_slice %49 {offsets = [3, 0], sizes = [5, 256], strides = [1, 1]} : vector<8x256xf32> to vector<5x256xf32>
    %52 = tpu.concatenate %51, %50 in 0 : vector<5x256xf32>, vector<3x256xf32> -> vector<8x256xf32>
    %53 = arith.addf %46, %52 : vector<8x256xf32>
    %54 = arith.negf %53 : vector<8x256xf32>
    %55 = math.exp %54 : vector<8x256xf32>
    %cst_34 = arith.constant 1.000000e+00 : f32
    %56 = vector.broadcast %cst_34 : f32 to vector<8x256xf32>
    %57 = arith.addf %56, %55 : vector<8x256xf32>
    %58 = arith.divf %56, %57 : vector<8x256xf32>
    %c0_35 = arith.constant 0 : index
    %c0_36 = arith.constant 0 : index
    %c0_37 = arith.constant 0 : index
    %c0_38 = arith.constant 0 : index
    %59 = vector.load %arg2[%c0_35, %c0_36, %c0_37, %c0_38] : memref<1x4x8x256xf32, #tpu.memory_space<vmem>>, vector<1x4x8x256xf32>
    %60 = vector.shape_cast %59 : vector<1x4x8x256xf32> to vector<4x8x256xf32>
    %61 = vector.shape_cast %58 : vector<8x256xf32> to vector<1x8x256xf32>
    %62 = vector.broadcast %61 : vector<1x8x256xf32> to vector<4x8x256xf32>
    %63 = arith.mulf %60, %62 : vector<4x8x256xf32>
    %c0_39 = arith.constant 0 : index
    %c0_40 = arith.constant 0 : index
    %c0_41 = arith.constant 0 : index
    %c0_42 = arith.constant 0 : index
    %64 = vector.load %arg3[%c0_39, %c0_40, %c0_41, %c0_42] : memref<1x4x8x256xf32, #tpu.memory_space<vmem>>, vector<1x4x8x256xf32>
    %65 = vector.shape_cast %64 : vector<1x4x8x256xf32> to vector<4x8x256xf32>
    %66 = vector.shape_cast %63 : vector<4x8x256xf32> to vector<1x4x8x256xf32>
    tpu.vector_store %arg3[%c0_39, %c0_40, %c0_41, %c0_42], %66 {strides = array<i32>} : memref<1x4x8x256xf32, #tpu.memory_space<vmem>>, vector<1x4x8x256xf32>,
    return
  }
  func.func @transform_0(%arg0: i32) -> (i32, i32, i32) {
    %c0_i32 = arith.constant 0 : i32
    %c0_i32_0 = arith.constant 0 : i32
    %c0_i32_1 = arith.constant 0 : i32
    %c0_i32_2 = arith.constant 0 : i32
    return %c0_i32, %c0_i32_0, %c0_i32_1 : i32, i32, i32
  }
  func.func @transform_1(%arg0: i32) -> (i32, i32, i32, i32) {
    %c0_i32 = arith.constant 0 : i32
    %c0_i32_0 = arith.constant 0 : i32
    %c0_i32_1 = arith.constant 0 : i32
    %c0_i32_2 = arith.constant 0 : i32
    return %arg0, %c0_i32, %c0_i32_0, %c0_i32_1 : i32, i32, i32, i32
  }
  func.func @transform_2(%arg0: i32) -> (i32, i32, i32, i32) {
    %c0_i32 = arith.constant 0 : i32
    %c0_i32_0 = arith.constant 0 : i32
    %c0_i32_1 = arith.constant 0 : i32
    %c0_i32_2 = arith.constant 0 : i32
    return %arg0, %c0_i32, %c0_i32_0, %c0_i32_1 : i32, i32, i32, i32
  }
}

</mosaic_0001>

<llo_original>
// kernel: tpu_custom_call.1
$region0: #{tpu_custom_call.1}
  #allocation0 [shape = 'u32[]', space=smem, size = 0x4, offset = 0x4, fixed_abs, tag = 'smem constant byte address 0x4 - core index']
  #allocation1 [shape = 'u32[72,128]{1,0:T(1,128)}', space=vmem, size = 0x9000, scoped, tag = 'internal scratch']
  %s0 = inlined_call_operand.hbm [shape: f32[7,512,256], index: 0, kind: input, shape index: {}]
  %s1 = inlined_call_operand.hbm [shape: f32[2,4,8,256], index: 1, kind: input, shape index: {}, may-alias: {1,2}]
  %s2 = inlined_call_operand.hbm [shape: f32[2,4,8,256], index: 2, kind: output, shape index: {}, may-alias: {1,2}]
  %s3 = sld [smem:[#allocation0]]
  $region49: #{tpu_custom_call.1} parent=0
    _
  %s5 = ssub.s32 1, %s3
  %s6 = scalar_select 0, %s5, %s3
  $region1: #{tpu_custom_call.1} parent=0
    #allocation2 [shape = 'u8[3670016]{0}', space=vmem, size = 0x380000, scoped, tag = 'input window, operand 0, single buffered']
    #allocation3 [shape = 's32[2]{0}', space=sflag, size = 0x8, scoped, tag = 'scoped memory for tpu_custom_call.1']
    #allocation4 [shape = 's32[2]{0}', space=sflag, size = 0x8, scoped, tag = 'scoped memory for tpu_custom_call.1']
    #allocation5 [shape = 'u8[65536]{0}', space=vmem, size = 0x10000, scoped, tag = 'input window, operand 1']
    #allocation6 [shape = 's32[2]{0}', space=sflag, size = 0x8, scoped, tag = 'scoped memory for tpu_custom_call.1']
    #allocation7 [shape = 'u8[65536]{0}', space=vmem, size = 0x10000, scoped, tag = 'output window, operand 0']
    %7 = vsyncpa [#allocation3], 0
    %8 = vsyncpa [#allocation6], 0
    %s9 = scalar_lea.sflag [#allocation6], 1
    %10 = vsyncpa %s9, 0
    %11 = vsyncpa [#allocation4], 0
    %s12 = scalar_lea.sflag [#allocation4], 1
    %13 = vsyncpa %s12, 0
    loop: start=0, step=1, limit=4
    $region2: #{tpu_custom_call.1} parent=1 // loop_pre_header
      _
    $region3: #{tpu_custom_call.1} parent=1 // loop_header
      %s15 = sphi 0, %s19
      %p16 = scmp.ge.s32.totalorder %s15, 4
      %s23 = sphi 0, %s23
      %s25 = sphi 0, %s23
      %s26 = sphi 0, %s25
      %s40 = sphi 0, %s26
      %s46 = sphi 0, %s48
      %s49 = sphi 0, %s46
      %s50 = sphi 0, %s49
      %s66 = sphi 0, %s50
      %s72 = sphi 0, %s74
      %s75 = sphi 0, %s72
      %s76 = sphi 0, %s75
      %s92 = sphi 0, %s76
    $region4: #{tpu_custom_call.1} parent=1 // loop_header_branch
      %18 = sbr.rel (%p16) target = $region8
    $region5: #{tpu_custom_call.1} parent=1 // loop_body
      %s20 = ssub.s32 %s15, 1
      %s21 = ssub.s32 %s15, 2
      %s22 = sadd.s32 %s15, 1
      %s24 = sadd.s32 %s23, 1
      %p27 = scmp.eq.s32.totalorder %s15, 1
      %p28 = scmp.ne.s32.totalorder %s23, %s25
      %p29 = scmp.eq.s32.totalorder %s15, 0
      %p30 = por %p28, %p29
      %p31 = scmp.ne.s32.totalorder %s23, %s25
      %p32 = scmp.eq.s32.totalorder %s20, 1
      %p33 = por %p31, %p32
      %p34 = scmp.ne.s32.totalorder %s25, %s26
      %p35 = scmp.eq.s32.totalorder %s20, 0
      %p36 = por %p34, %p35
      %p37 = scmp.ne.s32.totalorder %s25, %s26
      %p38 = scmp.eq.s32.totalorder %s21, 1
      %p39 = por %p37, %p38
      %p41 = scmp.ne.s32.totalorder %s26, %s40
      %p42 = scmp.eq.s32.totalorder %s21, 0
      %p43 = por %p41, %p42
      %s44 = ssub.s32 %s15, %s22
      %p45 = scmp.eq.s32.totalorder %s44, 0
      %s47 = sadd.s32 %s46, 1
      %s48 = scalar_select %p45, %s46, %s47
      %p51 = pneg %p45
      %p52 = scmp.eq.s32.totalorder %s15, 1
      %p53 = por %p51, %p52
      %p54 = scmp.ne.s32.totalorder %s46, %s49
      %p55 = scmp.eq.s32.totalorder %s15, 0
      %p56 = por %p54, %p55
      %p57 = scmp.ne.s32.totalorder %s46, %s49
      %p58 = scmp.eq.s32.totalorder %s20, 1
      %p59 = por %p57, %p58
      %p60 = scmp.ne.s32.totalorder %s49, %s50
      %p61 = scmp.eq.s32.totalorder %s20, 0
      %p62 = por %p60, %p61
      %p63 = scmp.ne.s32.totalorder %s49, %s50
      %p64 = scmp.eq.s32.totalorder %s21, 1
      %p65 = por %p63, %p64
      %p67 = scmp.ne.s32.totalorder %s50, %s66
      %p68 = scmp.eq.s32.totalorder %s21, 0
      %p69 = por %p67, %p68
      %s70 = ssub.s32 %s15, %s22
      %p71 = scmp.eq.s32.totalorder %s70, 0
      %s73 = sadd.s32 %s72, 1
      %s74 = scalar_select %p71, %s72, %s73
      %p77 = pneg %p71
      %p78 = scmp.eq.s32.totalorder %s15, 1
      %p79 = por %p77, %p78
      %p80 = scmp.ne.s32.totalorder %s72, %s75
      %p81 = scmp.eq.s32.totalorder %s15, 0
      %p82 = por %p80, %p81
      %p83 = scmp.ne.s32.totalorder %s72, %s75
      %p84 = scmp.eq.s32.totalorder %s20, 1
      %p85 = por %p83, %p84
      %p86 = scmp.ne.s32.totalorder %s75, %s76
      %p87 = scmp.eq.s32.totalorder %s20, 0
      %p88 = por %p86, %p87
      %p89 = scmp.ne.s32.totalorder %s75, %s76
      %p90 = scmp.eq.s32.totalorder %s21, 1
      %p91 = por %p89, %p90
      %p93 = scmp.ne.s32.totalorder %s76, %s92
      %p94 = scmp.eq.s32.totalorder %s21, 0
      %p95 = por %p93, %p94
      %p96 = scmp.le.s32.totalorder 1, %s15
      %p97 = scmp.lt.s32.totalorder %s15, 3
      %p98 = pnand %p96, %p97
      %p99 = pneg %p98
      // Predicated region
      $region9: #{tpu_custom_call.1} parent=5 // pred_check
        _
      $region10: #{tpu_custom_call.1} parent=5 // pred_check_branch
        %101 = sbr.rel (%p98) target = $region12
      $region11: #{tpu_custom_call.1} parent=5 // pred_region
        %s102 = ssub.s32 %s15, 1
        // Predicated region
        $region13: #{tpu_custom_call.1} parent=11 // pred_check
          %p103 = pneg %p36
        $region14: #{tpu_custom_call.1} parent=11 // pred_check_branch
          %105 = sbr.rel (%p103) target = $region16
        $region15: #{tpu_custom_call.1} parent=11 // pred_region
          %107 = vsyncadd [#allocation3], 0
          %s108 = sshll.u32 %s0, 4
          %s109 = int_to_ptr.hbm [resolvable:$true] %s108
          %s110 = sshll.u32 [#allocation2], 4
          %s111 = int_to_ptr.vmem [resolvable:$true] %s110
          %116 = dma.hbm_to_vmem [thread:$0]  %s109, 114688, %s111, [#allocation3], 256, 256, 16
        $region16: #{tpu_custom_call.1} parent=11 // pred_fallthru
          _
      $region12: #{tpu_custom_call.1} parent=5 // pred_fallthru
        _
      %p117 = scmp.lt.s32.totalorder %s15, 2
      // Predicated region
      $region17: #{tpu_custom_call.1} parent=5 // pred_check
        %p118 = pneg %p117
      $region18: #{tpu_custom_call.1} parent=5 // pred_check_branch
        %120 = sbr.rel (%p118) target = $region20
      $region19: #{tpu_custom_call.1} parent=5 // pred_region
        // Predicated region
        $region21: #{tpu_custom_call.1} parent=19 // pred_check
          %p121 = pneg %p56
        $region22: #{tpu_custom_call.1} parent=19 // pred_check_branch
          %123 = sbr.rel (%p121) target = $region24
        $region23: #{tpu_custom_call.1} parent=19 // pred_region
          %s124 = sand.u32 %s46, 1
          %s125 = scalar_lea.sflag [#allocation6], %s124
          %s126 = sand.u32 %s46, 1
          %s127 = smul.addr %s126, 64
          %s128 = scalar_lea.vmem [#allocation5], %s127
          %130 = vsyncadd %s125, 0
          %s131 = smul.addr %s15, 8
          %s132 = smul.addr %s131, 8
          %s133 = scalar_lea.hbm %s1, %s132
          %s134 = sshll.u32 %s133, 4
          %s135 = int_to_ptr.hbm [resolvable:$true] %s134
          %s136 = sshll.u32 %s128, 4
          %s137 = int_to_ptr.vmem [resolvable:$true] %s136
          %142 = dma.hbm_to_vmem [thread:$0]  %s135, 1024, %s137, %s125, 256, 256, 16
        $region24: #{tpu_custom_call.1} parent=19 // pred_fallthru
          _
      $region20: #{tpu_custom_call.1} parent=5 // pred_fallthru
        _
      %p143 = scmp.le.s32.totalorder 1, %s15
      %p144 = scmp.lt.s32.totalorder %s15, 3
      %p145 = pnand %p143, %p144
      %p146 = pneg %p145
      // Predicated region
      $region25: #{tpu_custom_call.1} parent=5 // pred_check
        _
      $region26: #{tpu_custom_call.1} parent=5 // pred_check_branch
        %148 = sbr.rel (%p145) target = $region28
      $region27: #{tpu_custom_call.1} parent=5 // pred_region
        %s149 = ssub.s32 %s15, 1
        // Predicated region
        $region29: #{tpu_custom_call.1} parent=27 // pred_check
          %p150 = pneg %p36
        $region30: #{tpu_custom_call.1} parent=27 // pred_check_branch
          %152 = sbr.rel (%p150) target = $region32
        $region31: #{tpu_custom_call.1} parent=27 // pred_region
          %154 = dma.done [#allocation3], 114688
        $region32: #{tpu_custom_call.1} parent=27 // pred_fallthru
          _
        %s155 = sand.u32 %s49, 1
        %s156 = scalar_lea.sflag [#allocation6], %s155
        %s157 = sand.u32 %s49, 1
        %s158 = smul.addr %s157, 64
        %s159 = scalar_lea.vmem [#allocation5], %s158
        // Predicated region
        $region33: #{tpu_custom_call.1} parent=27 // pred_check
          %p160 = pneg %p62
        $region34: #{tpu_custom_call.1} parent=27 // pred_check_branch
          %162 = sbr.rel (%p160) target = $region36
        $region35: #{tpu_custom_call.1} parent=27 // pred_region
          %164 = dma.done %s156, 1024
        $region36: #{tpu_custom_call.1} parent=27 // pred_fallthru
          _
        %p165 = pneg %p36
        %p166 = pneg %p33
        %s167 = sand.u32 %s49, 1
        %s168 = scalar_lea.sflag [#allocation6], %s167
        %s169 = sand.u32 %s49, 1
        %s170 = smul.addr %s169, 64
        %s171 = scalar_lea.vmem [#allocation5], %s170
        %p172 = pneg %p62
        %p173 = pneg %p59
        %p174 = pneg %p88
        %p175 = pneg %p85
        %s176 = sand.u32 %s75, 1
        %s177 = scalar_lea.sflag [#allocation4], %s176
        %s178 = sand.u32 %s75, 1
        %s179 = smul.addr %s178, 64
        %s180 = scalar_lea.vmem [#allocation7], %s179
        %v181 = vld [vmem:[%s159] sm:$0xff]
        %v182 = vld [vmem:[%s159 + $0x8] sm:$0xff]
        %v183 = vld [vmem:[%s159 + $0x10] sm:$0xff]
        %v184 = vld [vmem:[%s159 + $0x18] sm:$0xff]
        %v185 = vld [vmem:[%s159 + $0x20] sm:$0xff]
        %v186 = vld [vmem:[%s159 + $0x28] sm:$0xff]
        %v187 = vld [vmem:[%s159 + $0x30] sm:$0xff]
        %v188 = vld [vmem:[%s159 + $0x38] sm:$0xff]
        %v189 = vadd.f32 %v181, %v183
        %v190 = vadd.f32 %v189, %v185
        %v191 = vadd.f32 %v190, %v187
        %v192 = vadd.f32 %v182, %v184
        %v193 = vadd.f32 %v192, %v186
        %v194 = vadd.f32 %v193, %v188
        %v195 = vrcp.pop 4.0
        %v196 = vmul.f32 4.0, %v195
        %v197 = vsub.f32 1.0, %v196
        %v198 = vmul.f32 %v195, %v197
        %v199 = vadd.f32 %v195, %v198
        %vm200 = vweird.f32 %v195
        %v201 = vsel %vm200, %v195, %v199
        %v202 = vmul.f32 %v191, %v201
        %v203 = vmul.f32 %v194, %v201
        %v204 = vmax.f32 %v181, %v185
        %v205 = vmax.f32 %v183, %v187
        %v206 = vmax.f32 %v204, %v205
        %v207 = vmax.f32 %v182, %v186
        %v208 = vmax.f32 %v184, %v188
        %v209 = vmax.f32 %v207, %v208
        %v210 = vld [vmem:[#allocation2] sm:$0xff]
        %v211 = vld [vmem:[#allocation2 + $0x8] sm:$0xff]
        %v212 = vld [vmem:[#allocation2 + $0x10] sm:$0xff]
        %v213 = vld [vmem:[#allocation2 + $0x18] sm:$0xff]
        %v214 = vld [vmem:[#allocation2 + $0x20] sm:$0xff]
        %v215 = vld [vmem:[#allocation2 + $0x28] sm:$0xff]
        %v216 = vld [vmem:[#allocation2 + $0x30] sm:$0xff]
        %v217 = vld [vmem:[#allocation2 + $0x38] sm:$0xff]
        %v218 = vld [vmem:[#allocation2 + $0x40] sm:$0xff]
        %v219 = vld [vmem:[#allocation2 + $0x48] sm:$0xff]
        %v220 = vld [vmem:[#allocation2 + $0x50] sm:$0xff]
        %v221 = vld [vmem:[#allocation2 + $0x58] sm:$0xff]
        %v222 = vld [vmem:[#allocation2 + $0x60] sm:$0xff]
        %v223 = vld [vmem:[#allocation2 + $0x68] sm:$0xff]
        %v224 = vld [vmem:[#allocation2 + $0x70] sm:$0xff]
        %v225 = vld [vmem:[#allocation2 + $0x78] sm:$0xff]
        %v226 = vld [vmem:[#allocation2 + $0x80] sm:$0xff]
        %v227 = vld [vmem:[#allocation2 + $0x88] sm:$0xff]
        %v228 = vld [vmem:[#allocation2 + $0x90] sm:$0xff]
        %v229 = vld [vmem:[#allocation2 + $0x98] sm:$0xff]
        %v230 = vld [vmem:[#allocation2 + $0xa0] sm:$0xff]
        %v231 = vld [vmem:[#allocation2 + $0xa8] sm:$0xff]
        %v232 = vld [vmem:[#allocation2 + $0xb0] sm:$0xff]
        %v233 = vld [vmem:[#allocation2 + $0xb8] sm:$0xff]
        %v234 = vld [vmem:[#allocation2 + $0xc0] sm:$0xff]
        %v235 = vld [vmem:[#allocation2 + $0xc8] sm:$0xff]
        %v236 = vld [vmem:[#allocation2 + $0xd0] sm:$0xff]
        %v237 = vld [vmem:[#allocation2 + $0xd8] sm:$0xff]
        %v238 = vld [vmem:[#allocation2 + $0xe0] sm:$0xff]
        %v239 = vld [vmem:[#allocation2 + $0xe8] sm:$0xff]
        %v240 = vld [vmem:[#allocation2 + $0xf0] sm:$0xff]
        %v241 = vld [vmem:[#allocation2 + $0xf8] sm:$0xff]
        %v242 = vld [vmem:[#allocation2 + $0x100] sm:$0xff]
        %v243 = vld [vmem:[#allocation2 + $0x108] sm:$0xff]
        %v244 = vld [vmem:[#allocation2 + $0x110] sm:$0xff]
        %v245 = vld [vmem:[#allocation2 + $0x118] sm:$0xff]
        %v246 = vld [vmem:[#allocation2 + $0x120] sm:$0xff]
        %v247 = vld [vmem:[#allocation2 + $0x128] sm:$0xff]
        %v248 = vld [vmem:[#allocation2 + $0x130] sm:$0xff]
        %v249 = vld [vmem:[#allocation2 + $0x138] sm:$0xff]
        %v250 = vld [vmem:[#allocation2 + $0x140] sm:$0xff]
        %v251 = vld [vmem:[#allocation2 + $0x148] sm:$0xff]
        %v252 = vld [vmem:[#allocation2 + $0x150] sm:$0xff]
        %v253 = vld [vmem:[#allocation2 + $0x158] sm:$0xff]
        %v254 = vld [vmem:[#allocation2 + $0x160] sm:$0xff]
        %v255 = vld [vmem:[#allocation2 + $0x168] sm:$0xff]
        %v256 = vld [vmem:[#allocation2 + $0x170] sm:$0xff]
        %v257 = vld [vmem:[#allocation2 + $0x178] sm:$0xff]
        %v258 = vld [vmem:[#allocation2 + $0x180] sm:$0xff]
        %v259 = vld [vmem:[#allocation2 + $0x188] sm:$0xff]
        %v260 = vld [vmem:[#allocation2 + $0x190] sm:$0xff]
        %v261 = vld [vmem:[#allocation2 + $0x198] sm:$0xff]
        %v262 = vld [vmem:[#allocation2 + $0x1a0] sm:$0xff]
        %v263 = vld [vmem:[#allocation2 + $0x1a8] sm:$0xff]
        %v264 = vld [vmem:[#allocation2 + $0x1b0] sm:$0xff]
        %v265 = vld [vmem:[#allocation2 + $0x1b8] sm:$0xff]
        %v266 = vld [vmem:[#allocation2 + $0x1c0] sm:$0xff]
        %v267 = vld [vmem:[#allocation2 + $0x1c8] sm:$0xff]
        %v268 = vld [vmem:[#allocation2 + $0x1d0] sm:$0xff]
        %v269 = vld [vmem:[#allocation2 + $0x1d8] sm:$0xff]
        %v270 = vld [vmem:[#allocation2 + $0x1e0] sm:$0xff]
        %v271 = vld [vmem:[#allocation2 + $0x1e8] sm:$0xff]
        %v272 = vld [vmem:[#allocation2 + $0x1f0] sm:$0xff]
        %v273 = vld [vmem:[#allocation2 + $0x1f8] sm:$0xff]
        %v274 = vld [vmem:[#allocation2 + $0x200] sm:$0xff]
        %v275 = vld [vmem:[#allocation2 + $0x208] sm:$0xff]
        %v276 = vld [vmem:[#allocation2 + $0x210] sm:$0xff]
        %v277 = vld [vmem:[#allocation2 + $0x218] sm:$0xff]
        %v278 = vld [vmem:[#allocation2 + $0x220] sm:$0xff]
        %v279 = vld [vmem:[#allocation2 + $0x228] sm:$0xff]
        %v280 = vld [vmem:[#allocation2 + $0x230] sm:$0xff]
        %v281 = vld [vmem:[#allocation2 + $0x238] sm:$0xff]
        %v282 = vld [vmem:[#allocation2 + $0x240] sm:$0xff]
        %v283 = vld [vmem:[#allocation2 + $0x248] sm:$0xff]
        %v284 = vld [vmem:[#allocation2 + $0x250] sm:$0xff]
        %v285 = vld [vmem:[#allocation2 + $0x258] sm:$0xff]
        %v286 = vld [vmem:[#allocation2 + $0x260] sm:$0xff]
        %v287 = vld [vmem:[#allocation2 + $0x268] sm:$0xff]
        %v288 = vld [vmem:[#allocation2 + $0x270] sm:$0xff]
        %v289 = vld [vmem:[#allocation2 + $0x278] sm:$0xff]
        %v290 = vld [vmem:[#allocation2 + $0x280] sm:$0xff]
        %v291 = vld [vmem:[#allocation2 + $0x288] sm:$0xff]
        %v292 = vld [vmem:[#allocation2 + $0x290] sm:$0xff]
        %v293 = vld [vmem:[#allocation2 + $0x298] sm:$0xff]
        %v294 = vld [vmem:[#allocation2 + $0x2a0] sm:$0xff]
        %v295 = vld [vmem:[#allocation2 + $0x2a8] sm:$0xff]
        %v296 = vld [vmem:[#allocation2 + $0x2b0] sm:$0xff]
        %v297 = vld [vmem:[#allocation2 + $0x2b8] sm:$0xff]
        %v298 = vld [vmem:[#allocation2 + $0x2c0] sm:$0xff]
        %v299 = vld [vmem:[#allocation2 + $0x2c8] sm:$0xff]
        %v300 = vld [vmem:[#allocation2 + $0x2d0] sm:$0xff]
        %v301 = vld [vmem:[#allocation2 + $0x2d8] sm:$0xff]
        %v302 = vld [vmem:[#allocation2 + $0x2e0] sm:$0xff]
        %v303 = vld [vmem:[#allocation2 + $0x2e8] sm:$0xff]
        %v304 = vld [vmem:[#allocation2 + $0x2f0] sm:$0xff]
        %v305 = vld [vmem:[#allocation2 + $0x2f8] sm:$0xff]
        %v306 = vld [vmem:[#allocation2 + $0x300] sm:$0xff]
        %v307 = vld [vmem:[#allocation2 + $0x308] sm:$0xff]
        %v308 = vld [vmem:[#allocation2 + $0x310] sm:$0xff]
        %v309 = vld [vmem:[#allocation2 + $0x318] sm:$0xff]
        %v310 = vld [vmem:[#allocation2 + $0x320] sm:$0xff]
        %v311 = vld [vmem:[#allocation2 + $0x328] sm:$0xff]
        %v312 = vld [vmem:[#allocation2 + $0x330] sm:$0xff]
        %v313 = vld [vmem:[#allocation2 + $0x338] sm:$0xff]
        %v314 = vld [vmem:[#allocation2 + $0x340] sm:$0xff]
        %v315 = vld [vmem:[#allocation2 + $0x348] sm:$0xff]
        %v316 = vld [vmem:[#allocation2 + $0x350] sm:$0xff]
        %v317 = vld [vmem:[#allocation2 + $0x358] sm:$0xff]
        %v318 = vld [vmem:[#allocation2 + $0x360] sm:$0xff]
        %v319 = vld [vmem:[#allocation2 + $0x368] sm:$0xff]
        %v320 = vld [vmem:[#allocation2 + $0x370] sm:$0xff]
        %v321 = vld [vmem:[#allocation2 + $0x378] sm:$0xff]
        %v322 = vld [vmem:[#allocation2 + $0x380] sm:$0xff]
        %v323 = vld [vmem:[#allocation2 + $0x388] sm:$0xff]
        %v324 = vld [vmem:[#allocation2 + $0x390] sm:$0xff]
        %v325 = vld [vmem:[#allocation2 + $0x398] sm:$0xff]
        %v326 = vld [vmem:[#allocation2 + $0x3a0] sm:$0xff]
        %v327 = vld [vmem:[#allocation2 + $0x3a8] sm:$0xff]
        %v328 = vld [vmem:[#allocation2 + $0x3b0] sm:$0xff]
        %v329 = vld [vmem:[#allocation2 + $0x3b8] sm:$0xff]
        %v330 = vld [vmem:[#allocation2 + $0x3c0] sm:$0xff]
        %v331 = vld [vmem:[#allocation2 + $0x3c8] sm:$0xff]
        %v332 = vld [vmem:[#allocation2 + $0x3d0] sm:$0xff]
        %v333 = vld [vmem:[#allocation2 + $0x3d8] sm:$0xff]
        %v334 = vld [vmem:[#allocation2 + $0x3e0] sm:$0xff]
        %v335 = vld [vmem:[#allocation2 + $0x3e8] sm:$0xff]
        %v336 = vld [vmem:[#allocation2 + $0x3f0] sm:$0xff]
        %v337 = vld [vmem:[#allocation2 + $0x3f8] sm:$0xff]
        %338 = vmatpush.msra.mxu0 %v240
        %339 = vmatpush.msra.mxu0 %v238
        %340 = vmatpush.msra.mxu0 %v236
        %341 = vmatpush.msra.mxu0 %v234
        %342 = vmatpush.msra.mxu0 %v232
        %343 = vmatpush.msra.mxu0 %v230
        %344 = vmatpush.msra.mxu0 %v228
        %345 = vmatpush.msra.mxu0 %v226
        %346 = vmatpush.msra.mxu0 %v224
        %347 = vmatpush.msra.mxu0 %v222
        %348 = vmatpush.msra.mxu0 %v220
        %349 = vmatpush.msra.mxu0 %v218
        %350 = vmatpush.msra.mxu0 %v216
        %351 = vmatpush.msra.mxu0 %v214
        %352 = vmatpush.msra.mxu0 %v212
        %353 = vmatpush.msra.mxu0 %v210
        %354 = vmatmul.f32.gmra.mxu0 %v202
        %v355 = vpop.f32.mrf.mxu0
        %v356 = vadd.f32 0.0, %v355
        %357 = vdwg.mxu0
        %358 = vmatpush.msra.mxu0 %v272
        %359 = vmatpush.msra.mxu0 %v270
        %360 = vmatpush.msra.mxu0 %v268
        %361 = vmatpush.msra.mxu0 %v266
        %362 = vmatpush.msra.mxu0 %v264
        %363 = vmatpush.msra.mxu0 %v262
        %364 = vmatpush.msra.mxu0 %v260
        %365 = vmatpush.msra.mxu0 %v258
        %366 = vmatpush.msra.mxu0 %v256
        %367 = vmatpush.msra.mxu0 %v254
        %368 = vmatpush.msra.mxu0 %v252
        %369 = vmatpush.msra.mxu0 %v250
        %370 = vmatpush.msra.mxu0 %v248
        %371 = vmatpush.msra.mxu0 %v246
        %372 = vmatpush.msra.mxu0 %v244
        %373 = vmatpush.msra.mxu0 %v242
        %374 = vmatmul.f32.gmra.mxu0 %v203
        %v375 = vpop.f32.mrf.mxu0
        %v376 = vadd.f32 %v356, %v375
        %377 = vdwg.mxu0
        %378 = vmatpush.msra.mxu0 %v304
        %379 = vmatpush.msra.mxu0 %v302
        %380 = vmatpush.msra.mxu0 %v300
        %381 = vmatpush.msra.mxu0 %v298
        %382 = vmatpush.msra.mxu0 %v296
        %383 = vmatpush.msra.mxu0 %v294
        %384 = vmatpush.msra.mxu0 %v292
        %385 = vmatpush.msra.mxu0 %v290
        %386 = vmatpush.msra.mxu0 %v288
        %387 = vmatpush.msra.mxu0 %v286
        %388 = vmatpush.msra.mxu0 %v284
        %389 = vmatpush.msra.mxu0 %v282
        %390 = vmatpush.msra.mxu0 %v280
        %391 = vmatpush.msra.mxu0 %v278
        %392 = vmatpush.msra.mxu0 %v276
        %393 = vmatpush.msra.mxu0 %v274
        %394 = vmatmul.f32.gmra.mxu0 %v206
        %v395 = vpop.f32.mrf.mxu0
        %v396 = vadd.f32 %v376, %v395
        %397 = vdwg.mxu0
        %398 = vmatpush.msra.mxu0 %v336
        %399 = vmatpush.msra.mxu0 %v334
        %400 = vmatpush.msra.mxu0 %v332
        %401 = vmatpush.msra.mxu0 %v330
        %402 = vmatpush.msra.mxu0 %v328
        %403 = vmatpush.msra.mxu0 %v326
        %404 = vmatpush.msra.mxu0 %v324
        %405 = vmatpush.msra.mxu0 %v322
        %406 = vmatpush.msra.mxu0 %v320
        %407 = vmatpush.msra.mxu0 %v318
        %408 = vmatpush.msra.mxu0 %v316
        %409 = vmatpush.msra.mxu0 %v314
        %410 = vmatpush.msra.mxu0 %v312
        %411 = vmatpush.msra.mxu0 %v310
        %412 = vmatpush.msra.mxu0 %v308
        %413 = vmatpush.msra.mxu0 %v306
        %414 = vmatmul.f32.gmra.mxu0 %v209
        %v415 = vpop.f32.mrf.mxu0
        %v416 = vadd.f32 %v396, %v415
        %417 = vdwg.mxu0
        %418 = vmatpush.msra.mxu0 %v241
        %419 = vmatpush.msra.mxu0 %v239
        %420 = vmatpush.msra.mxu0 %v237
        %421 = vmatpush.msra.mxu0 %v235
        %422 = vmatpush.msra.mxu0 %v233
        %423 = vmatpush.msra.mxu0 %v231
        %424 = vmatpush.msra.mxu0 %v229
        %425 = vmatpush.msra.mxu0 %v227
        %426 = vmatpush.msra.mxu0 %v225
        %427 = vmatpush.msra.mxu0 %v223
        %428 = vmatpush.msra.mxu0 %v221
        %429 = vmatpush.msra.mxu0 %v219
        %430 = vmatpush.msra.mxu0 %v217
        %431 = vmatpush.msra.mxu0 %v215
        %432 = vmatpush.msra.mxu0 %v213
        %433 = vmatpush.msra.mxu0 %v211
        %434 = vmatmul.f32.gmra.mxu0 %v202
        %v435 = vpop.f32.mrf.mxu0
        %v436 = vadd.f32 0.0, %v435
        %437 = vdwg.mxu0
        %438 = vmatpush.msra.mxu0 %v273
        %439 = vmatpush.msra.mxu0 %v271
        %440 = vmatpush.msra.mxu0 %v269
        %441 = vmatpush.msra.mxu0 %v267
        %442 = vmatpush.msra.mxu0 %v265
        %443 = vmatpush.msra.mxu0 %v263
        %444 = vmatpush.msra.mxu0 %v261
        %445 = vmatpush.msra.mxu0 %v259
        %446 = vmatpush.msra.mxu0 %v257
        %447 = vmatpush.msra.mxu0 %v255
        %448 = vmatpush.msra.mxu0 %v253
        %449 = vmatpush.msra.mxu0 %v251
        %450 = vmatpush.msra.mxu0 %v249
        %451 = vmatpush.msra.mxu0 %v247
        %452 = vmatpush.msra.mxu0 %v245
        %453 = vmatpush.msra.mxu0 %v243
        %454 = vmatmul.f32.gmra.mxu0 %v203
        %v455 = vpop.f32.mrf.mxu0
        %v456 = vadd.f32 %v436, %v455
        %457 = vdwg.mxu0
        %458 = vmatpush.msra.mxu0 %v305
        %459 = vmatpush.msra.mxu0 %v303
        %460 = vmatpush.msra.mxu0 %v301
        %461 = vmatpush.msra.mxu0 %v299
        %462 = vmatpush.msra.mxu0 %v297
        %463 = vmatpush.msra.mxu0 %v295
        %464 = vmatpush.msra.mxu0 %v293
        %465 = vmatpush.msra.mxu0 %v291
        %466 = vmatpush.msra.mxu0 %v289
        %467 = vmatpush.msra.mxu0 %v287
        %468 = vmatpush.msra.mxu0 %v285
        %469 = vmatpush.msra.mxu0 %v283
        %470 = vmatpush.msra.mxu0 %v281
        %471 = vmatpush.msra.mxu0 %v279
        %472 = vmatpush.msra.mxu0 %v277
        %473 = vmatpush.msra.mxu0 %v275
        %474 = vmatmul.f32.gmra.mxu0 %v206
        %v475 = vpop.f32.mrf.mxu0
        %v476 = vadd.f32 %v456, %v475
        %477 = vdwg.mxu0
        %478 = vmatpush.msra.mxu0 %v337
        %479 = vmatpush.msra.mxu0 %v335
        %480 = vmatpush.msra.mxu0 %v333
        %481 = vmatpush.msra.mxu0 %v331
        %482 = vmatpush.msra.mxu0 %v329
        %483 = vmatpush.msra.mxu0 %v327
        %484 = vmatpush.msra.mxu0 %v325
        %485 = vmatpush.msra.mxu0 %v323
        %486 = vmatpush.msra.mxu0 %v321
        %487 = vmatpush.msra.mxu0 %v319
        %488 = vmatpush.msra.mxu0 %v317
        %489 = vmatpush.msra.mxu0 %v315
        %490 = vmatpush.msra.mxu0 %v313
        %491 = vmatpush.msra.mxu0 %v311
        %492 = vmatpush.msra.mxu0 %v309
        %493 = vmatpush.msra.mxu0 %v307
        %494 = vmatmul.f32.gmra.mxu0 %v209
        %v495 = vpop.f32.mrf.mxu0
        %v496 = vadd.f32 %v476, %v495
        %497 = vdwg.mxu0
        %v500 = vrot.slane %v416, 5
        %v501 = vrot.slane %v496, 5
        %vm504 = vcmask 1042432
        %v505 = vsel %vm504, 0.0, %v500
        %v506 = vsel %vm504, 0.0, %v501
        %v507 = vadd.f32 %v505, 0.0
        %v508 = vadd.f32 %v506, 0.0
        %s509 = scalar_lea.vmem [#allocation2], 1024
        %v510 = vld [vmem:[%s509] sm:$0xff]
        %v511 = vld [vmem:[%s509 + $0x8] sm:$0xff]
        %v512 = vld [vmem:[%s509 + $0x10] sm:$0xff]
        %v513 = vld [vmem:[%s509 + $0x18] sm:$0xff]
        %v514 = vld [vmem:[%s509 + $0x20] sm:$0xff]
        %v515 = vld [vmem:[%s509 + $0x28] sm:$0xff]
        %v516 = vld [vmem:[%s509 + $0x30] sm:$0xff]
        %v517 = vld [vmem:[%s509 + $0x38] sm:$0xff]
        %v518 = vld [vmem:[%s509 + $0x40] sm:$0xff]
        %v519 = vld [vmem:[%s509 + $0x48] sm:$0xff]
        %v520 = vld [vmem:[%s509 + $0x50] sm:$0xff]
        %v521 = vld [vmem:[%s509 + $0x58] sm:$0xff]
        %v522 = vld [vmem:[%s509 + $0x60] sm:$0xff]
        %v523 = vld [vmem:[%s509 + $0x68] sm:$0xff]
        %v524 = vld [vmem:[%s509 + $0x70] sm:$0xff]
        %v525 = vld [vmem:[%s509 + $0x78] sm:$0xff]
        %v526 = vld [vmem:[%s509 + $0x80] sm:$0xff]
        %v527 = vld [vmem:[%s509 + $0x88] sm:$0xff]
        %v528 = vld [vmem:[%s509 + $0x90] sm:$0xff]
        %v529 = vld [vmem:[%s509 + $0x98] sm:$0xff]
        %v530 = vld [vmem:[%s509 + $0xa0] sm:$0xff]
        %v531 = vld [vmem:[%s509 + $0xa8] sm:$0xff]
        %v532 = vld [vmem:[%s509 + $0xb0] sm:$0xff]
        %v533 = vld [vmem:[%s509 + $0xb8] sm:$0xff]
        %v534 = vld [vmem:[%s509 + $0xc0] sm:$0xff]
        %v535 = vld [vmem:[%s509 + $0xc8] sm:$0xff]
        %v536 = vld [vmem:[%s509 + $0xd0] sm:$0xff]
        %v537 = vld [vmem:[%s509 + $0xd8] sm:$0xff]
        %v538 = vld [vmem:[%s509 + $0xe0] sm:$0xff]
        %v539 = vld [vmem:[%s509 + $0xe8] sm:$0xff]
        %v540 = vld [vmem:[%s509 + $0xf0] sm:$0xff]
        %v541 = vld [vmem:[%s509 + $0xf8] sm:$0xff]
        %v542 = vld [vmem:[%s509 + $0x100] sm:$0xff]
        %v543 = vld [vmem:[%s509 + $0x108] sm:$0xff]
        %v544 = vld [vmem:[%s509 + $0x110] sm:$0xff]
        %v545 = vld [vmem:[%s509 + $0x118] sm:$0xff]
        %v546 = vld [vmem:[%s509 + $0x120] sm:$0xff]
        %v547 = vld [vmem:[%s509 + $0x128] sm:$0xff]
        %v548 = vld [vmem:[%s509 + $0x130] sm:$0xff]
        %v549 = vld [vmem:[%s509 + $0x138] sm:$0xff]
        %v550 = vld [vmem:[%s509 + $0x140] sm:$0xff]
        %v551 = vld [vmem:[%s509 + $0x148] sm:$0xff]
        %v552 = vld [vmem:[%s509 + $0x150] sm:$0xff]
        %v553 = vld [vmem:[%s509 + $0x158] sm:$0xff]
        %v554 = vld [vmem:[%s509 + $0x160] sm:$0xff]
        %v555 = vld [vmem:[%s509 + $0x168] sm:$0xff]
        %v556 = vld [vmem:[%s509 + $0x170] sm:$0xff]
        %v557 = vld [vmem:[%s509 + $0x178] sm:$0xff]
        %v558 = vld [vmem:[%s509 + $0x180] sm:$0xff]
        %v559 = vld [vmem:[%s509 + $0x188] sm:$0xff]
        %v560 = vld [vmem:[%s509 + $0x190] sm:$0xff]
        %v561 = vld [vmem:[%s509 + $0x198] sm:$0xff]
        %v562 = vld [vmem:[%s509 + $0x1a0] sm:$0xff]
        %v563 = vld [vmem:[%s509 + $0x1a8] sm:$0xff]
        %v564 = vld [vmem:[%s509 + $0x1b0] sm:$0xff]
        %v565 = vld [vmem:[%s509 + $0x1b8] sm:$0xff]
        %v566 = vld [vmem:[%s509 + $0x1c0] sm:$0xff]
        %v567 = vld [vmem:[%s509 + $0x1c8] sm:$0xff]
        %v568 = vld [vmem:[%s509 + $0x1d0] sm:$0xff]
        %v569 = vld [vmem:[%s509 + $0x1d8] sm:$0xff]
        %v570 = vld [vmem:[%s509 + $0x1e0] sm:$0xff]
        %v571 = vld [vmem:[%s509 + $0x1e8] sm:$0xff]
        %v572 = vld [vmem:[%s509 + $0x1f0] sm:$0xff]
        %v573 = vld [vmem:[%s509 + $0x1f8] sm:$0xff]
        %v574 = vld [vmem:[%s509 + $0x200] sm:$0xff]
        %v575 = vld [vmem:[%s509 + $0x208] sm:$0xff]
        %v576 = vld [vmem:[%s509 + $0x210] sm:$0xff]
        %v577 = vld [vmem:[%s509 + $0x218] sm:$0xff]
        %v578 = vld [vmem:[%s509 + $0x220] sm:$0xff]
        %v579 = vld [vmem:[%s509 + $0x228] sm:$0xff]
        %v580 = vld [vmem:[%s509 + $0x230] sm:$0xff]
        %v581 = vld [vmem:[%s509 + $0x238] sm:$0xff]
        %v582 = vld [vmem:[%s509 + $0x240] sm:$0xff]
        %v583 = vld [vmem:[%s509 + $0x248] sm:$0xff]
        %v584 = vld [vmem:[%s509 + $0x250] sm:$0xff]
        %v585 = vld [vmem:[%s509 + $0x258] sm:$0xff]
        %v586 = vld [vmem:[%s509 + $0x260] sm:$0xff]
        %v587 = vld [vmem:[%s509 + $0x268] sm:$0xff]
        %v588 = vld [vmem:[%s509 + $0x270] sm:$0xff]
        %v589 = vld [vmem:[%s509 + $0x278] sm:$0xff]
        %v590 = vld [vmem:[%s509 + $0x280] sm:$0xff]
        %v591 = vld [vmem:[%s509 + $0x288] sm:$0xff]
        %v592 = vld [vmem:[%s509 + $0x290] sm:$0xff]
        %v593 = vld [vmem:[%s509 + $0x298] sm:$0xff]
        %v594 = vld [vmem:[%s509 + $0x2a0] sm:$0xff]
        %v595 = vld [vmem:[%s509 + $0x2a8] sm:$0xff]
        %v596 = vld [vmem:[%s509 + $0x2b0] sm:$0xff]
        %v597 = vld [vmem:[%s509 + $0x2b8] sm:$0xff]
        %v598 = vld [vmem:[%s509 + $0x2c0] sm:$0xff]
        %v599 = vld [vmem:[%s509 + $0x2c8] sm:$0xff]
        %v600 = vld [vmem:[%s509 + $0x2d0] sm:$0xff]
        %v601 = vld [vmem:[%s509 + $0x2d8] sm:$0xff]
        %v602 = vld [vmem:[%s509 + $0x2e0] sm:$0xff]
        %v603 = vld [vmem:[%s509 + $0x2e8] sm:$0xff]
        %v604 = vld [vmem:[%s509 + $0x2f0] sm:$0xff]
        %v605 = vld [vmem:[%s509 + $0x2f8] sm:$0xff]
        %v606 = vld [vmem:[%s509 + $0x300] sm:$0xff]
        %v607 = vld [vmem:[%s509 + $0x308] sm:$0xff]
        %v608 = vld [vmem:[%s509 + $0x310] sm:$0xff]
        %v609 = vld [vmem:[%s509 + $0x318] sm:$0xff]
        %v610 = vld [vmem:[%s509 + $0x320] sm:$0xff]
        %v611 = vld [vmem:[%s509 + $0x328] sm:$0xff]
        %v612 = vld [vmem:[%s509 + $0x330] sm:$0xff]
        %v613 = vld [vmem:[%s509 + $0x338] sm:$0xff]
        %v614 = vld [vmem:[%s509 + $0x340] sm:$0xff]
        %v615 = vld [vmem:[%s509 + $0x348] sm:$0xff]
        %v616 = vld [vmem:[%s509 + $0x350] sm:$0xff]
        %v617 = vld [vmem:[%s509 + $0x358] sm:$0xff]
        %v618 = vld [vmem:[%s509 + $0x360] sm:$0xff]
        %v619 = vld [vmem:[%s509 + $0x368] sm:$0xff]
        %v620 = vld [vmem:[%s509 + $0x370] sm:$0xff]
        %v621 = vld [vmem:[%s509 + $0x378] sm:$0xff]
        %v622 = vld [vmem:[%s509 + $0x380] sm:$0xff]
        %v623 = vld [vmem:[%s509 + $0x388] sm:$0xff]
        %v624 = vld [vmem:[%s509 + $0x390] sm:$0xff]
        %v625 = vld [vmem:[%s509 + $0x398] sm:$0xff]
        %v626 = vld [vmem:[%s509 + $0x3a0] sm:$0xff]
        %v627 = vld [vmem:[%s509 + $0x3a8] sm:$0xff]
        %v628 = vld [vmem:[%s509 + $0x3b0] sm:$0xff]
        %v629 = vld [vmem:[%s509 + $0x3b8] sm:$0xff]
        %v630 = vld [vmem:[%s509 + $0x3c0] sm:$0xff]
        %v631 = vld [vmem:[%s509 + $0x3c8] sm:$0xff]
        %v632 = vld [vmem:[%s509 + $0x3d0] sm:$0xff]
        %v633 = vld [vmem:[%s509 + $0x3d8] sm:$0xff]
        %v634 = vld [vmem:[%s509 + $0x3e0] sm:$0xff]
        %v635 = vld [vmem:[%s509 + $0x3e8] sm:$0xff]
        %v636 = vld [vmem:[%s509 + $0x3f0] sm:$0xff]
        %v637 = vld [vmem:[%s509 + $0x3f8] sm:$0xff]
        %638 = vmatpush.msra.mxu0 %v540
        %639 = vmatpush.msra.mxu0 %v538
        %640 = vmatpush.msra.mxu0 %v536
        %641 = vmatpush.msra.mxu0 %v534
        %642 = vmatpush.msra.mxu0 %v532
        %643 = vmatpush.msra.mxu0 %v530
        %644 = vmatpush.msra.mxu0 %v528
        %645 = vmatpush.msra.mxu0 %v526
        %646 = vmatpush.msra.mxu0 %v524
        %647 = vmatpush.msra.mxu0 %v522
        %648 = vmatpush.msra.mxu0 %v520
        %649 = vmatpush.msra.mxu0 %v518
        %650 = vmatpush.msra.mxu0 %v516
        %651 = vmatpush.msra.mxu0 %v514
        %652 = vmatpush.msra.mxu0 %v512
        %653 = vmatpush.msra.mxu0 %v510
        %654 = vmatmul.f32.gmra.mxu0 %v202
        %v655 = vpop.f32.mrf.mxu0
        %v656 = vadd.f32 0.0, %v655
        %657 = vdwg.mxu0
        %658 = vmatpush.msra.mxu0 %v572
        %659 = vmatpush.msra.mxu0 %v570
        %660 = vmatpush.msra.mxu0 %v568
        %661 = vmatpush.msra.mxu0 %v566
        %662 = vmatpush.msra.mxu0 %v564
        %663 = vmatpush.msra.mxu0 %v562
        %664 = vmatpush.msra.mxu0 %v560
        %665 = vmatpush.msra.mxu0 %v558
        %666 = vmatpush.msra.mxu0 %v556
        %667 = vmatpush.msra.mxu0 %v554
        %668 = vmatpush.msra.mxu0 %v552
        %669 = vmatpush.msra.mxu0 %v550
        %670 = vmatpush.msra.mxu0 %v548
        %671 = vmatpush.msra.mxu0 %v546
        %672 = vmatpush.msra.mxu0 %v544
        %673 = vmatpush.msra.mxu0 %v542
        %674 = vmatmul.f32.gmra.mxu0 %v203
        %v675 = vpop.f32.mrf.mxu0
        %v676 = vadd.f32 %v656, %v675
        %677 = vdwg.mxu0
        %678 = vmatpush.msra.mxu0 %v604
        %679 = vmatpush.msra.mxu0 %v602
        %680 = vmatpush.msra.mxu0 %v600
        %681 = vmatpush.msra.mxu0 %v598
        %682 = vmatpush.msra.mxu0 %v596
        %683 = vmatpush.msra.mxu0 %v594
        %684 = vmatpush.msra.mxu0 %v592
        %685 = vmatpush.msra.mxu0 %v590
        %686 = vmatpush.msra.mxu0 %v588
        %687 = vmatpush.msra.mxu0 %v586
        %688 = vmatpush.msra.mxu0 %v584
        %689 = vmatpush.msra.mxu0 %v582
        %690 = vmatpush.msra.mxu0 %v580
        %691 = vmatpush.msra.mxu0 %v578
        %692 = vmatpush.msra.mxu0 %v576
        %693 = vmatpush.msra.mxu0 %v574
        %694 = vmatmul.f32.gmra.mxu0 %v206
        %v695 = vpop.f32.mrf.mxu0
        %v696 = vadd.f32 %v676, %v695
        %697 = vdwg.mxu0
        %698 = vmatpush.msra.mxu0 %v636
        %699 = vmatpush.msra.mxu0 %v634
        %700 = vmatpush.msra.mxu0 %v632
        %701 = vmatpush.msra.mxu0 %v630
        %702 = vmatpush.msra.mxu0 %v628
        %703 = vmatpush.msra.mxu0 %v626
        %704 = vmatpush.msra.mxu0 %v624
        %705 = vmatpush.msra.mxu0 %v622
        %706 = vmatpush.msra.mxu0 %v620
        %707 = vmatpush.msra.mxu0 %v618
        %708 = vmatpush.msra.mxu0 %v616
        %709 = vmatpush.msra.mxu0 %v614
        %710 = vmatpush.msra.mxu0 %v612
        %711 = vmatpush.msra.mxu0 %v610
        %712 = vmatpush.msra.mxu0 %v608
        %713 = vmatpush.msra.mxu0 %v606
        %714 = vmatmul.f32.gmra.mxu0 %v209
        %v715 = vpop.f32.mrf.mxu0
        %v716 = vadd.f32 %v696, %v715
        %717 = vdwg.mxu0
        %718 = vmatpush.msra.mxu0 %v541
        %719 = vmatpush.msra.mxu0 %v539
        %720 = vmatpush.msra.mxu0 %v537
        %721 = vmatpush.msra.mxu0 %v535
        %722 = vmatpush.msra.mxu0 %v533
        %723 = vmatpush.msra.mxu0 %v531
        %724 = vmatpush.msra.mxu0 %v529
        %725 = vmatpush.msra.mxu0 %v527
        %726 = vmatpush.msra.mxu0 %v525
        %727 = vmatpush.msra.mxu0 %v523
        %728 = vmatpush.msra.mxu0 %v521
        %729 = vmatpush.msra.mxu0 %v519
        %730 = vmatpush.msra.mxu0 %v517
        %731 = vmatpush.msra.mxu0 %v515
        %732 = vmatpush.msra.mxu0 %v513
        %733 = vmatpush.msra.mxu0 %v511
        %734 = vmatmul.f32.gmra.mxu0 %v202
        %v735 = vpop.f32.mrf.mxu0
        %v736 = vadd.f32 0.0, %v735
        %737 = vdwg.mxu0
        %738 = vmatpush.msra.mxu0 %v573
        %739 = vmatpush.msra.mxu0 %v571
        %740 = vmatpush.msra.mxu0 %v569
        %741 = vmatpush.msra.mxu0 %v567
        %742 = vmatpush.msra.mxu0 %v565
        %743 = vmatpush.msra.mxu0 %v563
        %744 = vmatpush.msra.mxu0 %v561
        %745 = vmatpush.msra.mxu0 %v559
        %746 = vmatpush.msra.mxu0 %v557
        %747 = vmatpush.msra.mxu0 %v555
        %748 = vmatpush.msra.mxu0 %v553
        %749 = vmatpush.msra.mxu0 %v551
        %750 = vmatpush.msra.mxu0 %v549
        %751 = vmatpush.msra.mxu0 %v547
        %752 = vmatpush.msra.mxu0 %v545
        %753 = vmatpush.msra.mxu0 %v543
        %754 = vmatmul.f32.gmra.mxu0 %v203
        %v755 = vpop.f32.mrf.mxu0
        %v756 = vadd.f32 %v736, %v755
        %757 = vdwg.mxu0
        %758 = vmatpush.msra.mxu0 %v605
        %759 = vmatpush.msra.mxu0 %v603
        %760 = vmatpush.msra.mxu0 %v601
        %761 = vmatpush.msra.mxu0 %v599
        %762 = vmatpush.msra.mxu0 %v597
        %763 = vmatpush.msra.mxu0 %v595
        %764 = vmatpush.msra.mxu0 %v593
        %765 = vmatpush.msra.mxu0 %v591
        %766 = vmatpush.msra.mxu0 %v589
        %767 = vmatpush.msra.mxu0 %v587
        %768 = vmatpush.msra.mxu0 %v585
        %769 = vmatpush.msra.mxu0 %v583
        %770 = vmatpush.msra.mxu0 %v581
        %771 = vmatpush.msra.mxu0 %v579
        %772 = vmatpush.msra.mxu0 %v577
        %773 = vmatpush.msra.mxu0 %v575
        %774 = vmatmul.f32.gmra.mxu0 %v206
        %v775 = vpop.f32.mrf.mxu0
        %v776 = vadd.f32 %v756, %v775
        %777 = vdwg.mxu0
        %778 = vmatpush.msra.mxu0 %v637
        %779 = vmatpush.msra.mxu0 %v635
        %780 = vmatpush.msra.mxu0 %v633
        %781 = vmatpush.msra.mxu0 %v631
        %782 = vmatpush.msra.mxu0 %v629
        %783 = vmatpush.msra.mxu0 %v627
        %784 = vmatpush.msra.mxu0 %v625
        %785 = vmatpush.msra.mxu0 %v623
        %786 = vmatpush.msra.mxu0 %v621
        %787 = vmatpush.msra.mxu0 %v619
        %788 = vmatpush.msra.mxu0 %v617
        %789 = vmatpush.msra.mxu0 %v615
        %790 = vmatpush.msra.mxu0 %v613
        %791 = vmatpush.msra.mxu0 %v611
        %792 = vmatpush.msra.mxu0 %v609
        %793 = vmatpush.msra.mxu0 %v607
        %794 = vmatmul.f32.gmra.mxu0 %v209
        %v795 = vpop.f32.mrf.mxu0
        %v796 = vadd.f32 %v776, %v795
        %797 = vdwg.mxu0
        %v800 = vrot.slane %v716, 6
        %v801 = vrot.slane %v796, 6
        %vm804 = vcmask 1041408
        %v805 = vsel %vm804, 0.0, %v800
        %v806 = vsel %vm804, 0.0, %v801
        %v807 = vadd.f32 %v507, %v805
        %v808 = vadd.f32 %v508, %v806
        %s809 = scalar_lea.vmem [#allocation2], 2048
        %v810 = vld [vmem:[%s809] sm:$0xff]
        %v811 = vld [vmem:[%s809 + $0x8] sm:$0xff]
        %v812 = vld [vmem:[%s809 + $0x10] sm:$0xff]
        %v813 = vld [vmem:[%s809 + $0x18] sm:$0xff]
        %v814 = vld [vmem:[%s809 + $0x20] sm:$0xff]
        %v815 = vld [vmem:[%s809 + $0x28] sm:$0xff]
        %v816 = vld [vmem:[%s809 + $0x30] sm:$0xff]
        %v817 = vld [vmem:[%s809 + $0x38] sm:$0xff]
        %v818 = vld [vmem:[%s809 + $0x40] sm:$0xff]
        %v819 = vld [vmem:[%s809 + $0x48] sm:$0xff]
        %v820 = vld [vmem:[%s809 + $0x50] sm:$0xff]
        %v821 = vld [vmem:[%s809 + $0x58] sm:$0xff]
        %v822 = vld [vmem:[%s809 + $0x60] sm:$0xff]
        %v823 = vld [vmem:[%s809 + $0x68] sm:$0xff]
        %v824 = vld [vmem:[%s809 + $0x70] sm:$0xff]
        %v825 = vld [vmem:[%s809 + $0x78] sm:$0xff]
        %v826 = vld [vmem:[%s809 + $0x80] sm:$0xff]
        %v827 = vld [vmem:[%s809 + $0x88] sm:$0xff]
        %v828 = vld [vmem:[%s809 + $0x90] sm:$0xff]
        %v829 = vld [vmem:[%s809 + $0x98] sm:$0xff]
        %v830 = vld [vmem:[%s809 + $0xa0] sm:$0xff]
        %v831 = vld [vmem:[%s809 + $0xa8] sm:$0xff]
        %v832 = vld [vmem:[%s809 + $0xb0] sm:$0xff]
        %v833 = vld [vmem:[%s809 + $0xb8] sm:$0xff]
        %v834 = vld [vmem:[%s809 + $0xc0] sm:$0xff]
        %v835 = vld [vmem:[%s809 + $0xc8] sm:$0xff]
        %v836 = vld [vmem:[%s809 + $0xd0] sm:$0xff]
        %v837 = vld [vmem:[%s809 + $0xd8] sm:$0xff]
        %v838 = vld [vmem:[%s809 + $0xe0] sm:$0xff]
        %v839 = vld [vmem:[%s809 + $0xe8] sm:$0xff]
        %v840 = vld [vmem:[%s809 + $0xf0] sm:$0xff]
        %v841 = vld [vmem:[%s809 + $0xf8] sm:$0xff]
        %v842 = vld [vmem:[%s809 + $0x100] sm:$0xff]
        %v843 = vld [vmem:[%s809 + $0x108] sm:$0xff]
        %v844 = vld [vmem:[%s809 + $0x110] sm:$0xff]
        %v845 = vld [vmem:[%s809 + $0x118] sm:$0xff]
        %v846 = vld [vmem:[%s809 + $0x120] sm:$0xff]
        %v847 = vld [vmem:[%s809 + $0x128] sm:$0xff]
        %v848 = vld [vmem:[%s809 + $0x130] sm:$0xff]
        %v849 = vld [vmem:[%s809 + $0x138] sm:$0xff]
        %v850 = vld [vmem:[%s809 + $0x140] sm:$0xff]
        %v851 = vld [vmem:[%s809 + $0x148] sm:$0xff]
        %v852 = vld [vmem:[%s809 + $0x150] sm:$0xff]
        %v853 = vld [vmem:[%s809 + $0x158] sm:$0xff]
        %v854 = vld [vmem:[%s809 + $0x160] sm:$0xff]
        %v855 = vld [vmem:[%s809 + $0x168] sm:$0xff]
        %v856 = vld [vmem:[%s809 + $0x170] sm:$0xff]
        %v857 = vld [vmem:[%s809 + $0x178] sm:$0xff]
        %v858 = vld [vmem:[%s809 + $0x180] sm:$0xff]
        %v859 = vld [vmem:[%s809 + $0x188] sm:$0xff]
        %v860 = vld [vmem:[%s809 + $0x190] sm:$0xff]
        %v861 = vld [vmem:[%s809 + $0x198] sm:$0xff]
        %v862 = vld [vmem:[%s809 + $0x1a0] sm:$0xff]
        %v863 = vld [vmem:[%s809 + $0x1a8] sm:$0xff]
        %v864 = vld [vmem:[%s809 + $0x1b0] sm:$0xff]
        %v865 = vld [vmem:[%s809 + $0x1b8] sm:$0xff]
        %v866 = vld [vmem:[%s809 + $0x1c0] sm:$0xff]
        %v867 = vld [vmem:[%s809 + $0x1c8] sm:$0xff]
        %v868 = vld [vmem:[%s809 + $0x1d0] sm:$0xff]
        %v869 = vld [vmem:[%s809 + $0x1d8] sm:$0xff]
        %v870 = vld [vmem:[%s809 + $0x1e0] sm:$0xff]
        %v871 = vld [vmem:[%s809 + $0x1e8] sm:$0xff]
        %v872 = vld [vmem:[%s809 + $0x1f0] sm:$0xff]
        %v873 = vld [vmem:[%s809 + $0x1f8] sm:$0xff]
        %v874 = vld [vmem:[%s809 + $0x200] sm:$0xff]
        %v875 = vld [vmem:[%s809 + $0x208] sm:$0xff]
        %v876 = vld [vmem:[%s809 + $0x210] sm:$0xff]
        %v877 = vld [vmem:[%s809 + $0x218] sm:$0xff]
        %v878 = vld [vmem:[%s809 + $0x220] sm:$0xff]
        %v879 = vld [vmem:[%s809 + $0x228] sm:$0xff]
        %v880 = vld [vmem:[%s809 + $0x230] sm:$0xff]
        %v881 = vld [vmem:[%s809 + $0x238] sm:$0xff]
        %v882 = vld [vmem:[%s809 + $0x240] sm:$0xff]
        %v883 = vld [vmem:[%s809 + $0x248] sm:$0xff]
        %v884 = vld [vmem:[%s809 + $0x250] sm:$0xff]
        %v885 = vld [vmem:[%s809 + $0x258] sm:$0xff]
        %v886 = vld [vmem:[%s809 + $0x260] sm:$0xff]
        %v887 = vld [vmem:[%s809 + $0x268] sm:$0xff]
        %v888 = vld [vmem:[%s809 + $0x270] sm:$0xff]
        %v889 = vld [vmem:[%s809 + $0x278] sm:$0xff]
        %v890 = vld [vmem:[%s809 + $0x280] sm:$0xff]
        %v891 = vld [vmem:[%s809 + $0x288] sm:$0xff]
        %v892 = vld [vmem:[%s809 + $0x290] sm:$0xff]
        %v893 = vld [vmem:[%s809 + $0x298] sm:$0xff]
        %v894 = vld [vmem:[%s809 + $0x2a0] sm:$0xff]
        %v895 = vld [vmem:[%s809 + $0x2a8] sm:$0xff]
        %v896 = vld [vmem:[%s809 + $0x2b0] sm:$0xff]
        %v897 = vld [vmem:[%s809 + $0x2b8] sm:$0xff]
        %v898 = vld [vmem:[%s809 + $0x2c0] sm:$0xff]
        %v899 = vld [vmem:[%s809 + $0x2c8] sm:$0xff]
        %v900 = vld [vmem:[%s809 + $0x2d0] sm:$0xff]
        %v901 = vld [vmem:[%s809 + $0x2d8] sm:$0xff]
        %v902 = vld [vmem:[%s809 + $0x2e0] sm:$0xff]
        %v903 = vld [vmem:[%s809 + $0x2e8] sm:$0xff]
        %v904 = vld [vmem:[%s809 + $0x2f0] sm:$0xff]
        %v905 = vld [vmem:[%s809 + $0x2f8] sm:$0xff]
        %v906 = vld [vmem:[%s809 + $0x300] sm:$0xff]
        %v907 = vld [vmem:[%s809 + $0x308] sm:$0xff]
        %v908 = vld [vmem:[%s809 + $0x310] sm:$0xff]
        %v909 = vld [vmem:[%s809 + $0x318] sm:$0xff]
        %v910 = vld [vmem:[%s809 + $0x320] sm:$0xff]
        %v911 = vld [vmem:[%s809 + $0x328] sm:$0xff]
        %v912 = vld [vmem:[%s809 + $0x330] sm:$0xff]
        %v913 = vld [vmem:[%s809 + $0x338] sm:$0xff]
        %v914 = vld [vmem:[%s809 + $0x340] sm:$0xff]
        %v915 = vld [vmem:[%s809 + $0x348] sm:$0xff]
        %v916 = vld [vmem:[%s809 + $0x350] sm:$0xff]
        %v917 = vld [vmem:[%s809 + $0x358] sm:$0xff]
        %v918 = vld [vmem:[%s809 + $0x360] sm:$0xff]
        %v919 = vld [vmem:[%s809 + $0x368] sm:$0xff]
        %v920 = vld [vmem:[%s809 + $0x370] sm:$0xff]
        %v921 = vld [vmem:[%s809 + $0x378] sm:$0xff]
        %v922 = vld [vmem:[%s809 + $0x380] sm:$0xff]
        %v923 = vld [vmem:[%s809 + $0x388] sm:$0xff]
        %v924 = vld [vmem:[%s809 + $0x390] sm:$0xff]
        %v925 = vld [vmem:[%s809 + $0x398] sm:$0xff]
        %v926 = vld [vmem:[%s809 + $0x3a0] sm:$0xff]
        %v927 = vld [vmem:[%s809 + $0x3a8] sm:$0xff]
        %v928 = vld [vmem:[%s809 + $0x3b0] sm:$0xff]
        %v929 = vld [vmem:[%s809 + $0x3b8] sm:$0xff]
        %v930 = vld [vmem:[%s809 + $0x3c0] sm:$0xff]
        %v931 = vld [vmem:[%s809 + $0x3c8] sm:$0xff]
        %v932 = vld [vmem:[%s809 + $0x3d0] sm:$0xff]
        %v933 = vld [vmem:[%s809 + $0x3d8] sm:$0xff]
        %v934 = vld [vmem:[%s809 + $0x3e0] sm:$0xff]
        %v935 = vld [vmem:[%s809 + $0x3e8] sm:$0xff]
        %v936 = vld [vmem:[%s809 + $0x3f0] sm:$0xff]
        %v937 = vld [vmem:[%s809 + $0x3f8] sm:$0xff]
        %938 = vmatpush.msra.mxu0 %v840
        %939 = vmatpush.msra.mxu0 %v838
        %940 = vmatpush.msra.mxu0 %v836
        %941 = vmatpush.msra.mxu0 %v834
        %942 = vmatpush.msra.mxu0 %v832
        %943 = vmatpush.msra.mxu0 %v830
        %944 = vmatpush.msra.mxu0 %v828
        %945 = vmatpush.msra.mxu0 %v826
        %946 = vmatpush.msra.mxu0 %v824
        %947 = vmatpush.msra.mxu0 %v822
        %948 = vmatpush.msra.mxu0 %v820
        %949 = vmatpush.msra.mxu0 %v818
        %950 = vmatpush.msra.mxu0 %v816
        %951 = vmatpush.msra.mxu0 %v814
        %952 = vmatpush.msra.mxu0 %v812
        %953 = vmatpush.msra.mxu0 %v810
        %954 = vmatmul.f32.gmra.mxu0 %v202
        %v955 = vpop.f32.mrf.mxu0
        %v956 = vadd.f32 0.0, %v955
        %957 = vdwg.mxu0
        %958 = vmatpush.msra.mxu0 %v872
        %959 = vmatpush.msra.mxu0 %v870
        %960 = vmatpush.msra.mxu0 %v868
        %961 = vmatpush.msra.mxu0 %v866
        %962 = vmatpush.msra.mxu0 %v864
        %963 = vmatpush.msra.mxu0 %v862
        %964 = vmatpush.msra.mxu0 %v860
        %965 = vmatpush.msra.mxu0 %v858
        %966 = vmatpush.msra.mxu0 %v856
        %967 = vmatpush.msra.mxu0 %v854
        %968 = vmatpush.msra.mxu0 %v852
        %969 = vmatpush.msra.mxu0 %v850
        %970 = vmatpush.msra.mxu0 %v848
        %971 = vmatpush.msra.mxu0 %v846
        %972 = vmatpush.msra.mxu0 %v844
        %973 = vmatpush.msra.mxu0 %v842
        %974 = vmatmul.f32.gmra.mxu0 %v203
        %v975 = vpop.f32.mrf.mxu0
        %v976 = vadd.f32 %v956, %v975
        %977 = vdwg.mxu0
        %978 = vmatpush.msra.mxu0 %v904
        %979 = vmatpush.msra.mxu0 %v902
        %980 = vmatpush.msra.mxu0 %v900
        %981 = vmatpush.msra.mxu0 %v898
        %982 = vmatpush.msra.mxu0 %v896
        %983 = vmatpush.msra.mxu0 %v894
        %984 = vmatpush.msra.mxu0 %v892
        %985 = vmatpush.msra.mxu0 %v890
        %986 = vmatpush.msra.mxu0 %v888
        %987 = vmatpush.msra.mxu0 %v886
        %988 = vmatpush.msra.mxu0 %v884
        %989 = vmatpush.msra.mxu0 %v882
        %990 = vmatpush.msra.mxu0 %v880
        %991 = vmatpush.msra.mxu0 %v878
        %992 = vmatpush.msra.mxu0 %v876
        %993 = vmatpush.msra.mxu0 %v874
        %994 = vmatmul.f32.gmra.mxu0 %v206
        %v995 = vpop.f32.mrf.mxu0
        %v996 = vadd.f32 %v976, %v995
        %997 = vdwg.mxu0
        %998 = vmatpush.msra.mxu0 %v936
        %999 = vmatpush.msra.mxu0 %v934
        %1000 = vmatpush.msra.mxu0 %v932
        %1001 = vmatpush.msra.mxu0 %v930
        %1002 = vmatpush.msra.mxu0 %v928
        %1003 = vmatpush.msra.mxu0 %v926
        %1004 = vmatpush.msra.mxu0 %v924
        %1005 = vmatpush.msra.mxu0 %v922
        %1006 = vmatpush.msra.mxu0 %v920
        %1007 = vmatpush.msra.mxu0 %v918
        %1008 = vmatpush.msra.mxu0 %v916
        %1009 = vmatpush.msra.mxu0 %v914
        %1010 = vmatpush.msra.mxu0 %v912
        %1011 = vmatpush.msra.mxu0 %v910
        %1012 = vmatpush.msra.mxu0 %v908
        %1013 = vmatpush.msra.mxu0 %v906
        %1014 = vmatmul.f32.gmra.mxu0 %v209
        %v1015 = vpop.f32.mrf.mxu0
        %v1016 = vadd.f32 %v996, %v1015
        %1017 = vdwg.mxu0
        %1018 = vmatpush.msra.mxu0 %v841
        %1019 = vmatpush.msra.mxu0 %v839
        %1020 = vmatpush.msra.mxu0 %v837
        %1021 = vmatpush.msra.mxu0 %v835
        %1022 = vmatpush.msra.mxu0 %v833
        %1023 = vmatpush.msra.mxu0 %v831
        %1024 = vmatpush.msra.mxu0 %v829
        %1025 = vmatpush.msra.mxu0 %v827
        %1026 = vmatpush.msra.mxu0 %v825
        %1027 = vmatpush.msra.mxu0 %v823
        %1028 = vmatpush.msra.mxu0 %v821
        %1029 = vmatpush.msra.mxu0 %v819
        %1030 = vmatpush.msra.mxu0 %v817
        %1031 = vmatpush.msra.mxu0 %v815
        %1032 = vmatpush.msra.mxu0 %v813
        %1033 = vmatpush.msra.mxu0 %v811
        %1034 = vmatmul.f32.gmra.mxu0 %v202
        %v1035 = vpop.f32.mrf.mxu0
        %v1036 = vadd.f32 0.0, %v1035
        %1037 = vdwg.mxu0
        %1038 = vmatpush.msra.mxu0 %v873
        %1039 = vmatpush.msra.mxu0 %v871
        %1040 = vmatpush.msra.mxu0 %v869
        %1041 = vmatpush.msra.mxu0 %v867
        %1042 = vmatpush.msra.mxu0 %v865
        %1043 = vmatpush.msra.mxu0 %v863
        %1044 = vmatpush.msra.mxu0 %v861
        %1045 = vmatpush.msra.mxu0 %v859
        %1046 = vmatpush.msra.mxu0 %v857
        %1047 = vmatpush.msra.mxu0 %v855
        %1048 = vmatpush.msra.mxu0 %v853
        %1049 = vmatpush.msra.mxu0 %v851
        %1050 = vmatpush.msra.mxu0 %v849
        %1051 = vmatpush.msra.mxu0 %v847
        %1052 = vmatpush.msra.mxu0 %v845
        %1053 = vmatpush.msra.mxu0 %v843
        %1054 = vmatmul.f32.gmra.mxu0 %v203
        %v1055 = vpop.f32.mrf.mxu0
        %v1056 = vadd.f32 %v1036, %v1055
        %1057 = vdwg.mxu0
        %1058 = vmatpush.msra.mxu0 %v905
        %1059 = vmatpush.msra.mxu0 %v903
        %1060 = vmatpush.msra.mxu0 %v901
        %1061 = vmatpush.msra.mxu0 %v899
        %1062 = vmatpush.msra.mxu0 %v897
        %1063 = vmatpush.msra.mxu0 %v895
        %1064 = vmatpush.msra.mxu0 %v893
        %1065 = vmatpush.msra.mxu0 %v891
        %1066 = vmatpush.msra.mxu0 %v889
        %1067 = vmatpush.msra.mxu0 %v887
        %1068 = vmatpush.msra.mxu0 %v885
        %1069 = vmatpush.msra.mxu0 %v883
        %1070 = vmatpush.msra.mxu0 %v881
        %1071 = vmatpush.msra.mxu0 %v879
        %1072 = vmatpush.msra.mxu0 %v877
        %1073 = vmatpush.msra.mxu0 %v875
        %1074 = vmatmul.f32.gmra.mxu0 %v206
        %v1075 = vpop.f32.mrf.mxu0
        %v1076 = vadd.f32 %v1056, %v1075
        %1077 = vdwg.mxu0
        %1078 = vmatpush.msra.mxu0 %v937
        %1079 = vmatpush.msra.mxu0 %v935
        %1080 = vmatpush.msra.mxu0 %v933
        %1081 = vmatpush.msra.mxu0 %v931
        %1082 = vmatpush.msra.mxu0 %v929
        %1083 = vmatpush.msra.mxu0 %v927
        %1084 = vmatpush.msra.mxu0 %v925
        %1085 = vmatpush.msra.mxu0 %v923
        %1086 = vmatpush.msra.mxu0 %v921
        %1087 = vmatpush.msra.mxu0 %v919
        %1088 = vmatpush.msra.mxu0 %v917
        %1089 = vmatpush.msra.mxu0 %v915
        %1090 = vmatpush.msra.mxu0 %v913
        %1091 = vmatpush.msra.mxu0 %v911
        %1092 = vmatpush.msra.mxu0 %v909
        %1093 = vmatpush.msra.mxu0 %v907
        %1094 = vmatmul.f32.gmra.mxu0 %v209
        %v1095 = vpop.f32.mrf.mxu0
        %v1096 = vadd.f32 %v1076, %v1095
        %1097 = vdwg.mxu0
        %v1100 = vrot.slane %v1016, 7
        %v1101 = vrot.slane %v1096, 7
        %vm1104 = vcmask 1040384
        %v1105 = vsel %vm1104, 0.0, %v1100
        %v1106 = vsel %vm1104, 0.0, %v1101
        %v1107 = vadd.f32 %v807, %v1105
        %v1108 = vadd.f32 %v808, %v1106
        %s1109 = scalar_lea.vmem [#allocation2], 3072
        %v1110 = vld [vmem:[%s1109] sm:$0xff]
        %v1111 = vld [vmem:[%s1109 + $0x8] sm:$0xff]
        %v1112 = vld [vmem:[%s1109 + $0x10] sm:$0xff]
        %v1113 = vld [vmem:[%s1109 + $0x18] sm:$0xff]
        %v1114 = vld [vmem:[%s1109 + $0x20] sm:$0xff]
        %v1115 = vld [vmem:[%s1109 + $0x28] sm:$0xff]
        %v1116 = vld [vmem:[%s1109 + $0x30] sm:$0xff]
        %v1117 = vld [vmem:[%s1109 + $0x38] sm:$0xff]
        %v1118 = vld [vmem:[%s1109 + $0x40] sm:$0xff]
        %v1119 = vld [vmem:[%s1109 + $0x48] sm:$0xff]
        %v1120 = vld [vmem:[%s1109 + $0x50] sm:$0xff]
        %v1121 = vld [vmem:[%s1109 + $0x58] sm:$0xff]
        %v1122 = vld [vmem:[%s1109 + $0x60] sm:$0xff]
        %v1123 = vld [vmem:[%s1109 + $0x68] sm:$0xff]
        %v1124 = vld [vmem:[%s1109 + $0x70] sm:$0xff]
        %v1125 = vld [vmem:[%s1109 + $0x78] sm:$0xff]
        %v1126 = vld [vmem:[%s1109 + $0x80] sm:$0xff]
        %v1127 = vld [vmem:[%s1109 + $0x88] sm:$0xff]
        %v1128 = vld [vmem:[%s1109 + $0x90] sm:$0xff]
        %v1129 = vld [vmem:[%s1109 + $0x98] sm:$0xff]
        %v1130 = vld [vmem:[%s1109 + $0xa0] sm:$0xff]
        %v1131 = vld [vmem:[%s1109 + $0xa8] sm:$0xff]
        %v1132 = vld [vmem:[%s1109 + $0xb0] sm:$0xff]
        %v1133 = vld [vmem:[%s1109 + $0xb8] sm:$0xff]
        %v1134 = vld [vmem:[%s1109 + $0xc0] sm:$0xff]
        %v1135 = vld [vmem:[%s1109 + $0xc8] sm:$0xff]
        %v1136 = vld [vmem:[%s1109 + $0xd0] sm:$0xff]
        %v1137 = vld [vmem:[%s1109 + $0xd8] sm:$0xff]
        %v1138 = vld [vmem:[%s1109 + $0xe0] sm:$0xff]
        %v1139 = vld [vmem:[%s1109 + $0xe8] sm:$0xff]
        %v1140 = vld [vmem:[%s1109 + $0xf0] sm:$0xff]
        %v1141 = vld [vmem:[%s1109 + $0xf8] sm:$0xff]
        %v1142 = vld [vmem:[%s1109 + $0x100] sm:$0xff]
        %v1143 = vld [vmem:[%s1109 + $0x108] sm:$0xff]
        %v1144 = vld [vmem:[%s1109 + $0x110] sm:$0xff]
        %v1145 = vld [vmem:[%s1109 + $0x118] sm:$0xff]
        %v1146 = vld [vmem:[%s1109 + $0x120] sm:$0xff]
        %v1147 = vld [vmem:[%s1109 + $0x128] sm:$0xff]
        %v1148 = vld [vmem:[%s1109 + $0x130] sm:$0xff]
        %v1149 = vld [vmem:[%s1109 + $0x138] sm:$0xff]
        %v1150 = vld [vmem:[%s1109 + $0x140] sm:$0xff]
        %v1151 = vld [vmem:[%s1109 + $0x148] sm:$0xff]
        %v1152 = vld [vmem:[%s1109 + $0x150] sm:$0xff]
        %v1153 = vld [vmem:[%s1109 + $0x158] sm:$0xff]
        %v1154 = vld [vmem:[%s1109 + $0x160] sm:$0xff]
        %v1155 = vld [vmem:[%s1109 + $0x168] sm:$0xff]
        %v1156 = vld [vmem:[%s1109 + $0x170] sm:$0xff]
        %v1157 = vld [vmem:[%s1109 + $0x178] sm:$0xff]
        %v1158 = vld [vmem:[%s1109 + $0x180] sm:$0xff]
        %v1159 = vld [vmem:[%s1109 + $0x188] sm:$0xff]
        %v1160 = vld [vmem:[%s1109 + $0x190] sm:$0xff]
        %v1161 = vld [vmem:[%s1109 + $0x198] sm:$0xff]
        %v1162 = vld [vmem:[%s1109 + $0x1a0] sm:$0xff]
        %v1163 = vld [vmem:[%s1109 + $0x1a8] sm:$0xff]
        %v1164 = vld [vmem:[%s1109 + $0x1b0] sm:$0xff]
        %v1165 = vld [vmem:[%s1109 + $0x1b8] sm:$0xff]
        %v1166 = vld [vmem:[%s1109 + $0x1c0] sm:$0xff]
        %v1167 = vld [vmem:[%s1109 + $0x1c8] sm:$0xff]
        %v1168 = vld [vmem:[%s1109 + $0x1d0] sm:$0xff]
        %v1169 = vld [vmem:[%s1109 + $0x1d8] sm:$0xff]
        %v1170 = vld [vmem:[%s1109 + $0x1e0] sm:$0xff]
        %v1171 = vld [vmem:[%s1109 + $0x1e8] sm:$0xff]
        %v1172 = vld [vmem:[%s1109 + $0x1f0] sm:$0xff]
        %v1173 = vld [vmem:[%s1109 + $0x1f8] sm:$0xff]
        %v1174 = vld [vmem:[%s1109 + $0x200] sm:$0xff]
        %v1175 = vld [vmem:[%s1109 + $0x208] sm:$0xff]
        %v1176 = vld [vmem:[%s1109 + $0x210] sm:$0xff]
        %v1177 = vld [vmem:[%s1109 + $0x218] sm:$0xff]
        %v1178 = vld [vmem:[%s1109 + $0x220] sm:$0xff]
        %v1179 = vld [vmem:[%s1109 + $0x228] sm:$0xff]
        %v1180 = vld [vmem:[%s1109 + $0x230] sm:$0xff]
        %v1181 = vld [vmem:[%s1109 + $0x238] sm:$0xff]
        %v1182 = vld [vmem:[%s1109 + $0x240] sm:$0xff]
        %v1183 = vld [vmem:[%s1109 + $0x248] sm:$0xff]
        %v1184 = vld [vmem:[%s1109 + $0x250] sm:$0xff]
        %v1185 = vld [vmem:[%s1109 + $0x258] sm:$0xff]
        %v1186 = vld [vmem:[%s1109 + $0x260] sm:$0xff]
        %v1187 = vld [vmem:[%s1109 + $0x268] sm:$0xff]
        %v1188 = vld [vmem:[%s1109 + $0x270] sm:$0xff]
        %v1189 = vld [vmem:[%s1109 + $0x278] sm:$0xff]
        %v1190 = vld [vmem:[%s1109 + $0x280] sm:$0xff]
        %v1191 = vld [vmem:[%s1109 + $0x288] sm:$0xff]
        %v1192 = vld [vmem:[%s1109 + $0x290] sm:$0xff]
        %v1193 = vld [vmem:[%s1109 + $0x298] sm:$0xff]
        %v1194 = vld [vmem:[%s1109 + $0x2a0] sm:$0xff]
        %v1195 = vld [vmem:[%s1109 + $0x2a8] sm:$0xff]
        %v1196 = vld [vmem:[%s1109 + $0x2b0] sm:$0xff]
        %v1197 = vld [vmem:[%s1109 + $0x2b8] sm:$0xff]
        %v1198 = vld [vmem:[%s1109 + $0x2c0] sm:$0xff]
        %v1199 = vld [vmem:[%s1109 + $0x2c8] sm:$0xff]
        %v1200 = vld [vmem:[%s1109 + $0x2d0] sm:$0xff]
        %v1201 = vld [vmem:[%s1109 + $0x2d8] sm:$0xff]
        %v1202 = vld [vmem:[%s1109 + $0x2e0] sm:$0xff]
        %v1203 = vld [vmem:[%s1109 + $0x2e8] sm:$0xff]
        %v1204 = vld [vmem:[%s1109 + $0x2f0] sm:$0xff]
        %v1205 = vld [vmem:[%s1109 + $0x2f8] sm:$0xff]
        %v1206 = vld [vmem:[%s1109 + $0x300] sm:$0xff]
        %v1207 = vld [vmem:[%s1109 + $0x308] sm:$0xff]
        %v1208 = vld [vmem:[%s1109 + $0x310] sm:$0xff]
        %v1209 = vld [vmem:[%s1109 + $0x318] sm:$0xff]
        %v1210 = vld [vmem:[%s1109 + $0x320] sm:$0xff]
        %v1211 = vld [vmem:[%s1109 + $0x328] sm:$0xff]
        %v1212 = vld [vmem:[%s1109 + $0x330] sm:$0xff]
        %v1213 = vld [vmem:[%s1109 + $0x338] sm:$0xff]
        %v1214 = vld [vmem:[%s1109 + $0x340] sm:$0xff]
        %v1215 = vld [vmem:[%s1109 + $0x348] sm:$0xff]
        %v1216 = vld [vmem:[%s1109 + $0x350] sm:$0xff]
        %v1217 = vld [vmem:[%s1109 + $0x358] sm:$0xff]
        %v1218 = vld [vmem:[%s1109 + $0x360] sm:$0xff]
        %v1219 = vld [vmem:[%s1109 + $0x368] sm:$0xff]
        %v1220 = vld [vmem:[%s1109 + $0x370] sm:$0xff]
        %v1221 = vld [vmem:[%s1109 + $0x378] sm:$0xff]
        %v1222 = vld [vmem:[%s1109 + $0x380] sm:$0xff]
        %v1223 = vld [vmem:[%s1109 + $0x388] sm:$0xff]
        %v1224 = vld [vmem:[%s1109 + $0x390] sm:$0xff]
        %v1225 = vld [vmem:[%s1109 + $0x398] sm:$0xff]
        %v1226 = vld [vmem:[%s1109 + $0x3a0] sm:$0xff]
        %v1227 = vld [vmem:[%s1109 + $0x3a8] sm:$0xff]
        %v1228 = vld [vmem:[%s1109 + $0x3b0] sm:$0xff]
        %v1229 = vld [vmem:[%s1109 + $0x3b8] sm:$0xff]
        %v1230 = vld [vmem:[%s1109 + $0x3c0] sm:$0xff]
        %v1231 = vld [vmem:[%s1109 + $0x3c8] sm:$0xff]
        %v1232 = vld [vmem:[%s1109 + $0x3d0] sm:$0xff]
        %v1233 = vld [vmem:[%s1109 + $0x3d8] sm:$0xff]
        %v1234 = vld [vmem:[%s1109 + $0x3e0] sm:$0xff]
        %v1235 = vld [vmem:[%s1109 + $0x3e8] sm:$0xff]
        %v1236 = vld [vmem:[%s1109 + $0x3f0] sm:$0xff]
        %v1237 = vld [vmem:[%s1109 + $0x3f8] sm:$0xff]
        %1238 = vmatpush.msra.mxu0 %v1140
        %1239 = vmatpush.msra.mxu0 %v1138
        %1240 = vmatpush.msra.mxu0 %v1136
        %1241 = vmatpush.msra.mxu0 %v1134
        %1242 = vmatpush.msra.mxu0 %v1132
        %1243 = vmatpush.msra.mxu0 %v1130
        %1244 = vmatpush.msra.mxu0 %v1128
        %1245 = vmatpush.msra.mxu0 %v1126
        %1246 = vmatpush.msra.mxu0 %v1124
        %1247 = vmatpush.msra.mxu0 %v1122
        %1248 = vmatpush.msra.mxu0 %v1120
        %1249 = vmatpush.msra.mxu0 %v1118
        %1250 = vmatpush.msra.mxu0 %v1116
        %1251 = vmatpush.msra.mxu0 %v1114
        %1252 = vmatpush.msra.mxu0 %v1112
        %1253 = vmatpush.msra.mxu0 %v1110
        %1254 = vmatmul.f32.gmra.mxu0 %v202
        %v1255 = vpop.f32.mrf.mxu0
        %v1256 = vadd.f32 0.0, %v1255
        %1257 = vdwg.mxu0
        %1258 = vmatpush.msra.mxu0 %v1172
        %1259 = vmatpush.msra.mxu0 %v1170
        %1260 = vmatpush.msra.mxu0 %v1168
        %1261 = vmatpush.msra.mxu0 %v1166
        %1262 = vmatpush.msra.mxu0 %v1164
        %1263 = vmatpush.msra.mxu0 %v1162
        %1264 = vmatpush.msra.mxu0 %v1160
        %1265 = vmatpush.msra.mxu0 %v1158
        %1266 = vmatpush.msra.mxu0 %v1156
        %1267 = vmatpush.msra.mxu0 %v1154
        %1268 = vmatpush.msra.mxu0 %v1152
        %1269 = vmatpush.msra.mxu0 %v1150
        %1270 = vmatpush.msra.mxu0 %v1148
        %1271 = vmatpush.msra.mxu0 %v1146
        %1272 = vmatpush.msra.mxu0 %v1144
        %1273 = vmatpush.msra.mxu0 %v1142
        %1274 = vmatmul.f32.gmra.mxu0 %v203
        %v1275 = vpop.f32.mrf.mxu0
        %v1276 = vadd.f32 %v1256, %v1275
        %1277 = vdwg.mxu0
        %1278 = vmatpush.msra.mxu0 %v1204
        %1279 = vmatpush.msra.mxu0 %v1202
        %1280 = vmatpush.msra.mxu0 %v1200
        %1281 = vmatpush.msra.mxu0 %v1198
        %1282 = vmatpush.msra.mxu0 %v1196
        %1283 = vmatpush.msra.mxu0 %v1194
        %1284 = vmatpush.msra.mxu0 %v1192
        %1285 = vmatpush.msra.mxu0 %v1190
        %1286 = vmatpush.msra.mxu0 %v1188
        %1287 = vmatpush.msra.mxu0 %v1186
        %1288 = vmatpush.msra.mxu0 %v1184
        %1289 = vmatpush.msra.mxu0 %v1182
        %1290 = vmatpush.msra.mxu0 %v1180
        %1291 = vmatpush.msra.mxu0 %v1178
        %1292 = vmatpush.msra.mxu0 %v1176
        %1293 = vmatpush.msra.mxu0 %v1174
        %1294 = vmatmul.f32.gmra.mxu0 %v206
        %v1295 = vpop.f32.mrf.mxu0
        %v1296 = vadd.f32 %v1276, %v1295
        %1297 = vdwg.mxu0
        %1298 = vmatpush.msra.mxu0 %v1236
        %1299 = vmatpush.msra.mxu0 %v1234
        %1300 = vmatpush.msra.mxu0 %v1232
        %1301 = vmatpush.msra.mxu0 %v1230
        %1302 = vmatpush.msra.mxu0 %v1228
        %1303 = vmatpush.msra.mxu0 %v1226
        %1304 = vmatpush.msra.mxu0 %v1224
        %1305 = vmatpush.msra.mxu0 %v1222
        %1306 = vmatpush.msra.mxu0 %v1220
        %1307 = vmatpush.msra.mxu0 %v1218
        %1308 = vmatpush.msra.mxu0 %v1216
        %1309 = vmatpush.msra.mxu0 %v1214
        %1310 = vmatpush.msra.mxu0 %v1212
        %1311 = vmatpush.msra.mxu0 %v1210
        %1312 = vmatpush.msra.mxu0 %v1208
        %1313 = vmatpush.msra.mxu0 %v1206
        %1314 = vmatmul.f32.gmra.mxu0 %v209
        %v1315 = vpop.f32.mrf.mxu0
        %v1316 = vadd.f32 %v1296, %v1315
        %1317 = vdwg.mxu0
        %1318 = vmatpush.msra.mxu0 %v1141
        %1319 = vmatpush.msra.mxu0 %v1139
        %1320 = vmatpush.msra.mxu0 %v1137
        %1321 = vmatpush.msra.mxu0 %v1135
        %1322 = vmatpush.msra.mxu0 %v1133
        %1323 = vmatpush.msra.mxu0 %v1131
        %1324 = vmatpush.msra.mxu0 %v1129
        %1325 = vmatpush.msra.mxu0 %v1127
        %1326 = vmatpush.msra.mxu0 %v1125
        %1327 = vmatpush.msra.mxu0 %v1123
        %1328 = vmatpush.msra.mxu0 %v1121
        %1329 = vmatpush.msra.mxu0 %v1119
        %1330 = vmatpush.msra.mxu0 %v1117
        %1331 = vmatpush.msra.mxu0 %v1115
        %1332 = vmatpush.msra.mxu0 %v1113
        %1333 = vmatpush.msra.mxu0 %v1111
        %1334 = vmatmul.f32.gmra.mxu0 %v202
        %v1335 = vpop.f32.mrf.mxu0
        %v1336 = vadd.f32 0.0, %v1335
        %1337 = vdwg.mxu0
        %1338 = vmatpush.msra.mxu0 %v1173
        %1339 = vmatpush.msra.mxu0 %v1171
        %1340 = vmatpush.msra.mxu0 %v1169
        %1341 = vmatpush.msra.mxu0 %v1167
        %1342 = vmatpush.msra.mxu0 %v1165
        %1343 = vmatpush.msra.mxu0 %v1163
        %1344 = vmatpush.msra.mxu0 %v1161
        %1345 = vmatpush.msra.mxu0 %v1159
        %1346 = vmatpush.msra.mxu0 %v1157
        %1347 = vmatpush.msra.mxu0 %v1155
        %1348 = vmatpush.msra.mxu0 %v1153
        %1349 = vmatpush.msra.mxu0 %v1151
        %1350 = vmatpush.msra.mxu0 %v1149
        %1351 = vmatpush.msra.mxu0 %v1147
        %1352 = vmatpush.msra.mxu0 %v1145
        %1353 = vmatpush.msra.mxu0 %v1143
        %1354 = vmatmul.f32.gmra.mxu0 %v203
        %v1355 = vpop.f32.mrf.mxu0
        %v1356 = vadd.f32 %v1336, %v1355
        %1357 = vdwg.mxu0
        %1358 = vmatpush.msra.mxu0 %v1205
        %1359 = vmatpush.msra.mxu0 %v1203
        %1360 = vmatpush.msra.mxu0 %v1201
        %1361 = vmatpush.msra.mxu0 %v1199
        %1362 = vmatpush.msra.mxu0 %v1197
        %1363 = vmatpush.msra.mxu0 %v1195
        %1364 = vmatpush.msra.mxu0 %v1193
        %1365 = vmatpush.msra.mxu0 %v1191
        %1366 = vmatpush.msra.mxu0 %v1189
        %1367 = vmatpush.msra.mxu0 %v1187
        %1368 = vmatpush.msra.mxu0 %v1185
        %1369 = vmatpush.msra.mxu0 %v1183
        %1370 = vmatpush.msra.mxu0 %v1181
        %1371 = vmatpush.msra.mxu0 %v1179
        %1372 = vmatpush.msra.mxu0 %v1177
        %1373 = vmatpush.msra.mxu0 %v1175
        %1374 = vmatmul.f32.gmra.mxu0 %v206
        %v1375 = vpop.f32.mrf.mxu0
        %v1376 = vadd.f32 %v1356, %v1375
        %1377 = vdwg.mxu0
        %1378 = vmatpush.msra.mxu0 %v1237
        %1379 = vmatpush.msra.mxu0 %v1235
        %1380 = vmatpush.msra.mxu0 %v1233
        %1381 = vmatpush.msra.mxu0 %v1231
        %1382 = vmatpush.msra.mxu0 %v1229
        %1383 = vmatpush.msra.mxu0 %v1227
        %1384 = vmatpush.msra.mxu0 %v1225
        %1385 = vmatpush.msra.mxu0 %v1223
        %1386 = vmatpush.msra.mxu0 %v1221
        %1387 = vmatpush.msra.mxu0 %v1219
        %1388 = vmatpush.msra.mxu0 %v1217
        %1389 = vmatpush.msra.mxu0 %v1215
        %1390 = vmatpush.msra.mxu0 %v1213
        %1391 = vmatpush.msra.mxu0 %v1211
        %1392 = vmatpush.msra.mxu0 %v1209
        %1393 = vmatpush.msra.mxu0 %v1207
        %1394 = vmatmul.f32.gmra.mxu0 %v209
        %v1395 = vpop.f32.mrf.mxu0
        %v1396 = vadd.f32 %v1376, %v1395
        %1397 = vdwg.mxu0
        %v1398 = vadd.f32 %v1107, %v1316
        %v1399 = vadd.f32 %v1108, %v1396
        %s1400 = scalar_lea.vmem [#allocation2], 4096
        %v1401 = vld [vmem:[%s1400] sm:$0xff]
        %v1402 = vld [vmem:[%s1400 + $0x8] sm:$0xff]
        %v1403 = vld [vmem:[%s1400 + $0x10] sm:$0xff]
        %v1404 = vld [vmem:[%s1400 + $0x18] sm:$0xff]
        %v1405 = vld [vmem:[%s1400 + $0x20] sm:$0xff]
        %v1406 = vld [vmem:[%s1400 + $0x28] sm:$0xff]
        %v1407 = vld [vmem:[%s1400 + $0x30] sm:$0xff]
        %v1408 = vld [vmem:[%s1400 + $0x38] sm:$0xff]
        %v1409 = vld [vmem:[%s1400 + $0x40] sm:$0xff]
        %v1410 = vld [vmem:[%s1400 + $0x48] sm:$0xff]
        %v1411 = vld [vmem:[%s1400 + $0x50] sm:$0xff]
        %v1412 = vld [vmem:[%s1400 + $0x58] sm:$0xff]
        %v1413 = vld [vmem:[%s1400 + $0x60] sm:$0xff]
        %v1414 = vld [vmem:[%s1400 + $0x68] sm:$0xff]
        %v1415 = vld [vmem:[%s1400 + $0x70] sm:$0xff]
        %v1416 = vld [vmem:[%s1400 + $0x78] sm:$0xff]
        %v1417 = vld [vmem:[%s1400 + $0x80] sm:$0xff]
        %v1418 = vld [vmem:[%s1400 + $0x88] sm:$0xff]
        %v1419 = vld [vmem:[%s1400 + $0x90] sm:$0xff]
        %v1420 = vld [vmem:[%s1400 + $0x98] sm:$0xff]
        %v1421 = vld [vmem:[%s1400 + $0xa0] sm:$0xff]
        %v1422 = vld [vmem:[%s1400 + $0xa8] sm:$0xff]
        %v1423 = vld [vmem:[%s1400 + $0xb0] sm:$0xff]
        %v1424 = vld [vmem:[%s1400 + $0xb8] sm:$0xff]
        %v1425 = vld [vmem:[%s1400 + $0xc0] sm:$0xff]
        %v1426 = vld [vmem:[%s1400 + $0xc8] sm:$0xff]
        %v1427 = vld [vmem:[%s1400 + $0xd0] sm:$0xff]
        %v1428 = vld [vmem:[%s1400 + $0xd8] sm:$0xff]
        %v1429 = vld [vmem:[%s1400 + $0xe0] sm:$0xff]
        %v1430 = vld [vmem:[%s1400 + $0xe8] sm:$0xff]
        %v1431 = vld [vmem:[%s1400 + $0xf0] sm:$0xff]
        %v1432 = vld [vmem:[%s1400 + $0xf8] sm:$0xff]
        %v1433 = vld [vmem:[%s1400 + $0x100] sm:$0xff]
        %v1434 = vld [vmem:[%s1400 + $0x108] sm:$0xff]
        %v1435 = vld [vmem:[%s1400 + $0x110] sm:$0xff]
        %v1436 = vld [vmem:[%s1400 + $0x118] sm:$0xff]
        %v1437 = vld [vmem:[%s1400 + $0x120] sm:$0xff]
        %v1438 = vld [vmem:[%s1400 + $0x128] sm:$0xff]
        %v1439 = vld [vmem:[%s1400 + $0x130] sm:$0xff]
        %v1440 = vld [vmem:[%s1400 + $0x138] sm:$0xff]
        %v1441 = vld [vmem:[%s1400 + $0x140] sm:$0xff]
        %v1442 = vld [vmem:[%s1400 + $0x148] sm:$0xff]
        %v1443 = vld [vmem:[%s1400 + $0x150] sm:$0xff]
        %v1444 = vld [vmem:[%s1400 + $0x158] sm:$0xff]
        %v1445 = vld [vmem:[%s1400 + $0x160] sm:$0xff]
        %v1446 = vld [vmem:[%s1400 + $0x168] sm:$0xff]
        %v1447 = vld [vmem:[%s1400 + $0x170] sm:$0xff]
        %v1448 = vld [vmem:[%s1400 + $0x178] sm:$0xff]
        %v1449 = vld [vmem:[%s1400 + $0x180] sm:$0xff]
        %v1450 = vld [vmem:[%s1400 + $0x188] sm:$0xff]
        %v1451 = vld [vmem:[%s1400 + $0x190] sm:$0xff]
        %v1452 = vld [vmem:[%s1400 + $0x198] sm:$0xff]
        %v1453 = vld [vmem:[%s1400 + $0x1a0] sm:$0xff]
        %v1454 = vld [vmem:[%s1400 + $0x1a8] sm:$0xff]
        %v1455 = vld [vmem:[%s1400 + $0x1b0] sm:$0xff]
        %v1456 = vld [vmem:[%s1400 + $0x1b8] sm:$0xff]
        %v1457 = vld [vmem:[%s1400 + $0x1c0] sm:$0xff]
        %v1458 = vld [vmem:[%s1400 + $0x1c8] sm:$0xff]
        %v1459 = vld [vmem:[%s1400 + $0x1d0] sm:$0xff]
        %v1460 = vld [vmem:[%s1400 + $0x1d8] sm:$0xff]
        %v1461 = vld [vmem:[%s1400 + $0x1e0] sm:$0xff]
        %v1462 = vld [vmem:[%s1400 + $0x1e8] sm:$0xff]
        %v1463 = vld [vmem:[%s1400 + $0x1f0] sm:$0xff]
        %v1464 = vld [vmem:[%s1400 + $0x1f8] sm:$0xff]
        %v1465 = vld [vmem:[%s1400 + $0x200] sm:$0xff]
        %v1466 = vld [vmem:[%s1400 + $0x208] sm:$0xff]
        %v1467 = vld [vmem:[%s1400 + $0x210] sm:$0xff]
        %v1468 = vld [vmem:[%s1400 + $0x218] sm:$0xff]
        %v1469 = vld [vmem:[%s1400 + $0x220] sm:$0xff]
        %v1470 = vld [vmem:[%s1400 + $0x228] sm:$0xff]
        %v1471 = vld [vmem:[%s1400 + $0x230] sm:$0xff]
        %v1472 = vld [vmem:[%s1400 + $0x238] sm:$0xff]
        %v1473 = vld [vmem:[%s1400 + $0x240] sm:$0xff]
        %v1474 = vld [vmem:[%s1400 + $0x248] sm:$0xff]
        %v1475 = vld [vmem:[%s1400 + $0x250] sm:$0xff]
        %v1476 = vld [vmem:[%s1400 + $0x258] sm:$0xff]
        %v1477 = vld [vmem:[%s1400 + $0x260] sm:$0xff]
        %v1478 = vld [vmem:[%s1400 + $0x268] sm:$0xff]
        %v1479 = vld [vmem:[%s1400 + $0x270] sm:$0xff]
        %v1480 = vld [vmem:[%s1400 + $0x278] sm:$0xff]
        %v1481 = vld [vmem:[%s1400 + $0x280] sm:$0xff]
        %v1482 = vld [vmem:[%s1400 + $0x288] sm:$0xff]
        %v1483 = vld [vmem:[%s1400 + $0x290] sm:$0xff]
        %v1484 = vld [vmem:[%s1400 + $0x298] sm:$0xff]
        %v1485 = vld [vmem:[%s1400 + $0x2a0] sm:$0xff]
        %v1486 = vld [vmem:[%s1400 + $0x2a8] sm:$0xff]
        %v1487 = vld [vmem:[%s1400 + $0x2b0] sm:$0xff]
        %v1488 = vld [vmem:[%s1400 + $0x2b8] sm:$0xff]
        %v1489 = vld [vmem:[%s1400 + $0x2c0] sm:$0xff]
        %v1490 = vld [vmem:[%s1400 + $0x2c8] sm:$0xff]
        %v1491 = vld [vmem:[%s1400 + $0x2d0] sm:$0xff]
        %v1492 = vld [vmem:[%s1400 + $0x2d8] sm:$0xff]
        %v1493 = vld [vmem:[%s1400 + $0x2e0] sm:$0xff]
        %v1494 = vld [vmem:[%s1400 + $0x2e8] sm:$0xff]
        %v1495 = vld [vmem:[%s1400 + $0x2f0] sm:$0xff]
        %v1496 = vld [vmem:[%s1400 + $0x2f8] sm:$0xff]
        %v1497 = vld [vmem:[%s1400 + $0x300] sm:$0xff]
        %v1498 = vld [vmem:[%s1400 + $0x308] sm:$0xff]
        %v1499 = vld [vmem:[%s1400 + $0x310] sm:$0xff]
        %v1500 = vld [vmem:[%s1400 + $0x318] sm:$0xff]
        %v1501 = vld [vmem:[%s1400 + $0x320] sm:$0xff]
        %v1502 = vld [vmem:[%s1400 + $0x328] sm:$0xff]
        %v1503 = vld [vmem:[%s1400 + $0x330] sm:$0xff]
        %v1504 = vld [vmem:[%s1400 + $0x338] sm:$0xff]
        %v1505 = vld [vmem:[%s1400 + $0x340] sm:$0xff]
        %v1506 = vld [vmem:[%s1400 + $0x348] sm:$0xff]
        %v1507 = vld [vmem:[%s1400 + $0x350] sm:$0xff]
        %v1508 = vld [vmem:[%s1400 + $0x358] sm:$0xff]
        %v1509 = vld [vmem:[%s1400 + $0x360] sm:$0xff]
        %v1510 = vld [vmem:[%s1400 + $0x368] sm:$0xff]
        %v1511 = vld [vmem:[%s1400 + $0x370] sm:$0xff]
        %v1512 = vld [vmem:[%s1400 + $0x378] sm:$0xff]
        %v1513 = vld [vmem:[%s1400 + $0x380] sm:$0xff]
        %v1514 = vld [vmem:[%s1400 + $0x388] sm:$0xff]
        %v1515 = vld [vmem:[%s1400 + $0x390] sm:$0xff]
        %v1516 = vld [vmem:[%s1400 + $0x398] sm:$0xff]
        %v1517 = vld [vmem:[%s1400 + $0x3a0] sm:$0xff]
        %v1518 = vld [vmem:[%s1400 + $0x3a8] sm:$0xff]
        %v1519 = vld [vmem:[%s1400 + $0x3b0] sm:$0xff]
        %v1520 = vld [vmem:[%s1400 + $0x3b8] sm:$0xff]
        %v1521 = vld [vmem:[%s1400 + $0x3c0] sm:$0xff]
        %v1522 = vld [vmem:[%s1400 + $0x3c8] sm:$0xff]
        %v1523 = vld [vmem:[%s1400 + $0x3d0] sm:$0xff]
        %v1524 = vld [vmem:[%s1400 + $0x3d8] sm:$0xff]
        %v1525 = vld [vmem:[%s1400 + $0x3e0] sm:$0xff]
        %v1526 = vld [vmem:[%s1400 + $0x3e8] sm:$0xff]
        %v1527 = vld [vmem:[%s1400 + $0x3f0] sm:$0xff]
        %v1528 = vld [vmem:[%s1400 + $0x3f8] sm:$0xff]
        %1529 = vmatpush.msra.mxu0 %v1431
        %1530 = vmatpush.msra.mxu0 %v1429
        %1531 = vmatpush.msra.mxu0 %v1427
        %1532 = vmatpush.msra.mxu0 %v1425
        %1533 = vmatpush.msra.mxu0 %v1423
        %1534 = vmatpush.msra.mxu0 %v1421
        %1535 = vmatpush.msra.mxu0 %v1419
        %1536 = vmatpush.msra.mxu0 %v1417
        %1537 = vmatpush.msra.mxu0 %v1415
        %1538 = vmatpush.msra.mxu0 %v1413
        %1539 = vmatpush.msra.mxu0 %v1411
        %1540 = vmatpush.msra.mxu0 %v1409
        %1541 = vmatpush.msra.mxu0 %v1407
        %1542 = vmatpush.msra.mxu0 %v1405
        %1543 = vmatpush.msra.mxu0 %v1403
        %1544 = vmatpush.msra.mxu0 %v1401
        %1545 = vmatmul.f32.gmra.mxu0 %v202
        %v1546 = vpop.f32.mrf.mxu0
        %v1547 = vadd.f32 0.0, %v1546
        %1548 = vdwg.mxu0
        %1549 = vmatpush.msra.mxu0 %v1463
        %1550 = vmatpush.msra.mxu0 %v1461
        %1551 = vmatpush.msra.mxu0 %v1459
        %1552 = vmatpush.msra.mxu0 %v1457
        %1553 = vmatpush.msra.mxu0 %v1455
        %1554 = vmatpush.msra.mxu0 %v1453
        %1555 = vmatpush.msra.mxu0 %v1451
        %1556 = vmatpush.msra.mxu0 %v1449
        %1557 = vmatpush.msra.mxu0 %v1447
        %1558 = vmatpush.msra.mxu0 %v1445
        %1559 = vmatpush.msra.mxu0 %v1443
        %1560 = vmatpush.msra.mxu0 %v1441
        %1561 = vmatpush.msra.mxu0 %v1439
        %1562 = vmatpush.msra.mxu0 %v1437
        %1563 = vmatpush.msra.mxu0 %v1435
        %1564 = vmatpush.msra.mxu0 %v1433
        %1565 = vmatmul.f32.gmra.mxu0 %v203
        %v1566 = vpop.f32.mrf.mxu0
        %v1567 = vadd.f32 %v1547, %v1566
        %1568 = vdwg.mxu0
        %1569 = vmatpush.msra.mxu0 %v1495
        %1570 = vmatpush.msra.mxu0 %v1493
        %1571 = vmatpush.msra.mxu0 %v1491
        %1572 = vmatpush.msra.mxu0 %v1489
        %1573 = vmatpush.msra.mxu0 %v1487
        %1574 = vmatpush.msra.mxu0 %v1485
        %1575 = vmatpush.msra.mxu0 %v1483
        %1576 = vmatpush.msra.mxu0 %v1481
        %1577 = vmatpush.msra.mxu0 %v1479
        %1578 = vmatpush.msra.mxu0 %v1477
        %1579 = vmatpush.msra.mxu0 %v1475
        %1580 = vmatpush.msra.mxu0 %v1473
        %1581 = vmatpush.msra.mxu0 %v1471
        %1582 = vmatpush.msra.mxu0 %v1469
        %1583 = vmatpush.msra.mxu0 %v1467
        %1584 = vmatpush.msra.mxu0 %v1465
        %1585 = vmatmul.f32.gmra.mxu0 %v206
        %v1586 = vpop.f32.mrf.mxu0
        %v1587 = vadd.f32 %v1567, %v1586
        %1588 = vdwg.mxu0
        %1589 = vmatpush.msra.mxu0 %v1527
        %1590 = vmatpush.msra.mxu0 %v1525
        %1591 = vmatpush.msra.mxu0 %v1523
        %1592 = vmatpush.msra.mxu0 %v1521
        %1593 = vmatpush.msra.mxu0 %v1519
        %1594 = vmatpush.msra.mxu0 %v1517
        %1595 = vmatpush.msra.mxu0 %v1515
        %1596 = vmatpush.msra.mxu0 %v1513
        %1597 = vmatpush.msra.mxu0 %v1511
        %1598 = vmatpush.msra.mxu0 %v1509
        %1599 = vmatpush.msra.mxu0 %v1507
        %1600 = vmatpush.msra.mxu0 %v1505
        %1601 = vmatpush.msra.mxu0 %v1503
        %1602 = vmatpush.msra.mxu0 %v1501
        %1603 = vmatpush.msra.mxu0 %v1499
        %1604 = vmatpush.msra.mxu0 %v1497
        %1605 = vmatmul.f32.gmra.mxu0 %v209
        %v1606 = vpop.f32.mrf.mxu0
        %v1607 = vadd.f32 %v1587, %v1606
        %1608 = vdwg.mxu0
        %1609 = vmatpush.msra.mxu0 %v1432
        %1610 = vmatpush.msra.mxu0 %v1430
        %1611 = vmatpush.msra.mxu0 %v1428
        %1612 = vmatpush.msra.mxu0 %v1426
        %1613 = vmatpush.msra.mxu0 %v1424
        %1614 = vmatpush.msra.mxu0 %v1422
        %1615 = vmatpush.msra.mxu0 %v1420
        %1616 = vmatpush.msra.mxu0 %v1418
        %1617 = vmatpush.msra.mxu0 %v1416
        %1618 = vmatpush.msra.mxu0 %v1414
        %1619 = vmatpush.msra.mxu0 %v1412
        %1620 = vmatpush.msra.mxu0 %v1410
        %1621 = vmatpush.msra.mxu0 %v1408
        %1622 = vmatpush.msra.mxu0 %v1406
        %1623 = vmatpush.msra.mxu0 %v1404
        %1624 = vmatpush.msra.mxu0 %v1402
        %1625 = vmatmul.f32.gmra.mxu0 %v202
        %v1626 = vpop.f32.mrf.mxu0
        %v1627 = vadd.f32 0.0, %v1626
        %1628 = vdwg.mxu0
        %1629 = vmatpush.msra.mxu0 %v1464
        %1630 = vmatpush.msra.mxu0 %v1462
        %1631 = vmatpush.msra.mxu0 %v1460
        %1632 = vmatpush.msra.mxu0 %v1458
        %1633 = vmatpush.msra.mxu0 %v1456
        %1634 = vmatpush.msra.mxu0 %v1454
        %1635 = vmatpush.msra.mxu0 %v1452
        %1636 = vmatpush.msra.mxu0 %v1450
        %1637 = vmatpush.msra.mxu0 %v1448
        %1638 = vmatpush.msra.mxu0 %v1446
        %1639 = vmatpush.msra.mxu0 %v1444
        %1640 = vmatpush.msra.mxu0 %v1442
        %1641 = vmatpush.msra.mxu0 %v1440
        %1642 = vmatpush.msra.mxu0 %v1438
        %1643 = vmatpush.msra.mxu0 %v1436
        %1644 = vmatpush.msra.mxu0 %v1434
        %1645 = vmatmul.f32.gmra.mxu0 %v203
        %v1646 = vpop.f32.mrf.mxu0
        %v1647 = vadd.f32 %v1627, %v1646
        %1648 = vdwg.mxu0
        %1649 = vmatpush.msra.mxu0 %v1496
        %1650 = vmatpush.msra.mxu0 %v1494
        %1651 = vmatpush.msra.mxu0 %v1492
        %1652 = vmatpush.msra.mxu0 %v1490
        %1653 = vmatpush.msra.mxu0 %v1488
        %1654 = vmatpush.msra.mxu0 %v1486
        %1655 = vmatpush.msra.mxu0 %v1484
        %1656 = vmatpush.msra.mxu0 %v1482
        %1657 = vmatpush.msra.mxu0 %v1480
        %1658 = vmatpush.msra.mxu0 %v1478
        %1659 = vmatpush.msra.mxu0 %v1476
        %1660 = vmatpush.msra.mxu0 %v1474
        %1661 = vmatpush.msra.mxu0 %v1472
        %1662 = vmatpush.msra.mxu0 %v1470
        %1663 = vmatpush.msra.mxu0 %v1468
        %1664 = vmatpush.msra.mxu0 %v1466
        %1665 = vmatmul.f32.gmra.mxu0 %v206
        %v1666 = vpop.f32.mrf.mxu0
        %v1667 = vadd.f32 %v1647, %v1666
        %1668 = vdwg.mxu0
        %1669 = vmatpush.msra.mxu0 %v1528
        %1670 = vmatpush.msra.mxu0 %v1526
        %1671 = vmatpush.msra.mxu0 %v1524
        %1672 = vmatpush.msra.mxu0 %v1522
        %1673 = vmatpush.msra.mxu0 %v1520
        %1674 = vmatpush.msra.mxu0 %v1518
        %1675 = vmatpush.msra.mxu0 %v1516
        %1676 = vmatpush.msra.mxu0 %v1514
        %1677 = vmatpush.msra.mxu0 %v1512
        %1678 = vmatpush.msra.mxu0 %v1510
        %1679 = vmatpush.msra.mxu0 %v1508
        %1680 = vmatpush.msra.mxu0 %v1506
        %1681 = vmatpush.msra.mxu0 %v1504
        %1682 = vmatpush.msra.mxu0 %v1502
        %1683 = vmatpush.msra.mxu0 %v1500
        %1684 = vmatpush.msra.mxu0 %v1498
        %1685 = vmatmul.f32.gmra.mxu0 %v209
        %v1686 = vpop.f32.mrf.mxu0
        %v1687 = vadd.f32 %v1667, %v1686
        %1688 = vdwg.mxu0
        %v1691 = vrot.slane %v1607, 1
        %v1692 = vrot.slane %v1687, 1
        %vm1695 = vcmask 1046528
        %v1696 = vsel %vm1695, %v1691, 0.0
        %v1697 = vsel %vm1695, %v1692, 0.0
        %v1698 = vadd.f32 %v1398, %v1696
        %v1699 = vadd.f32 %v1399, %v1697
        %s1700 = scalar_lea.vmem [#allocation2], 5120
        %v1701 = vld [vmem:[%s1700] sm:$0xff]
        %v1702 = vld [vmem:[%s1700 + $0x8] sm:$0xff]
        %v1703 = vld [vmem:[%s1700 + $0x10] sm:$0xff]
        %v1704 = vld [vmem:[%s1700 + $0x18] sm:$0xff]
        %v1705 = vld [vmem:[%s1700 + $0x20] sm:$0xff]
        %v1706 = vld [vmem:[%s1700 + $0x28] sm:$0xff]
        %v1707 = vld [vmem:[%s1700 + $0x30] sm:$0xff]
        %v1708 = vld [vmem:[%s1700 + $0x38] sm:$0xff]
        %v1709 = vld [vmem:[%s1700 + $0x40] sm:$0xff]
        %v1710 = vld [vmem:[%s1700 + $0x48] sm:$0xff]
        %v1711 = vld [vmem:[%s1700 + $0x50] sm:$0xff]
        %v1712 = vld [vmem:[%s1700 + $0x58] sm:$0xff]
        %v1713 = vld [vmem:[%s1700 + $0x60] sm:$0xff]
        %v1714 = vld [vmem:[%s1700 + $0x68] sm:$0xff]
        %v1715 = vld [vmem:[%s1700 + $0x70] sm:$0xff]
        %v1716 = vld [vmem:[%s1700 + $0x78] sm:$0xff]
        %v1717 = vld [vmem:[%s1700 + $0x80] sm:$0xff]
        %v1718 = vld [vmem:[%s1700 + $0x88] sm:$0xff]
        %v1719 = vld [vmem:[%s1700 + $0x90] sm:$0xff]
        %v1720 = vld [vmem:[%s1700 + $0x98] sm:$0xff]
        %v1721 = vld [vmem:[%s1700 + $0xa0] sm:$0xff]
        %v1722 = vld [vmem:[%s1700 + $0xa8] sm:$0xff]
        %v1723 = vld [vmem:[%s1700 + $0xb0] sm:$0xff]
        %v1724 = vld [vmem:[%s1700 + $0xb8] sm:$0xff]
        %v1725 = vld [vmem:[%s1700 + $0xc0] sm:$0xff]
        %v1726 = vld [vmem:[%s1700 + $0xc8] sm:$0xff]
        %v1727 = vld [vmem:[%s1700 + $0xd0] sm:$0xff]
        %v1728 = vld [vmem:[%s1700 + $0xd8] sm:$0xff]
        %v1729 = vld [vmem:[%s1700 + $0xe0] sm:$0xff]
        %v1730 = vld [vmem:[%s1700 + $0xe8] sm:$0xff]
        %v1731 = vld [vmem:[%s1700 + $0xf0] sm:$0xff]
        %v1732 = vld [vmem:[%s1700 + $0xf8] sm:$0xff]
        %v1733 = vld [vmem:[%s1700 + $0x100] sm:$0xff]
        %v1734 = vld [vmem:[%s1700 + $0x108] sm:$0xff]
        %v1735 = vld [vmem:[%s1700 + $0x110] sm:$0xff]
        %v1736 = vld [vmem:[%s1700 + $0x118] sm:$0xff]
        %v1737 = vld [vmem:[%s1700 + $0x120] sm:$0xff]
        %v1738 = vld [vmem:[%s1700 + $0x128] sm:$0xff]
        %v1739 = vld [vmem:[%s1700 + $0x130] sm:$0xff]
        %v1740 = vld [vmem:[%s1700 + $0x138] sm:$0xff]
        %v1741 = vld [vmem:[%s1700 + $0x140] sm:$0xff]
        %v1742 = vld [vmem:[%s1700 + $0x148] sm:$0xff]
        %v1743 = vld [vmem:[%s1700 + $0x150] sm:$0xff]
        %v1744 = vld [vmem:[%s1700 + $0x158] sm:$0xff]
        %v1745 = vld [vmem:[%s1700 + $0x160] sm:$0xff]
        %v1746 = vld [vmem:[%s1700 + $0x168] sm:$0xff]
        %v1747 = vld [vmem:[%s1700 + $0x170] sm:$0xff]
        %v1748 = vld [vmem:[%s1700 + $0x178] sm:$0xff]
        %v1749 = vld [vmem:[%s1700 + $0x180] sm:$0xff]
        %v1750 = vld [vmem:[%s1700 + $0x188] sm:$0xff]
        %v1751 = vld [vmem:[%s1700 + $0x190] sm:$0xff]
        %v1752 = vld [vmem:[%s1700 + $0x198] sm:$0xff]
        %v1753 = vld [vmem:[%s1700 + $0x1a0] sm:$0xff]
        %v1754 = vld [vmem:[%s1700 + $0x1a8] sm:$0xff]
        %v1755 = vld [vmem:[%s1700 + $0x1b0] sm:$0xff]
        %v1756 = vld [vmem:[%s1700 + $0x1b8] sm:$0xff]
        %v1757 = vld [vmem:[%s1700 + $0x1c0] sm:$0xff]
        %v1758 = vld [vmem:[%s1700 + $0x1c8] sm:$0xff]
        %v1759 = vld [vmem:[%s1700 + $0x1d0] sm:$0xff]
        %v1760 = vld [vmem:[%s1700 + $0x1d8] sm:$0xff]
        %v1761 = vld [vmem:[%s1700 + $0x1e0] sm:$0xff]
        %v1762 = vld [vmem:[%s1700 + $0x1e8] sm:$0xff]
        %v1763 = vld [vmem:[%s1700 + $0x1f0] sm:$0xff]
        %v1764 = vld [vmem:[%s1700 + $0x1f8] sm:$0xff]
        %v1765 = vld [vmem:[%s1700 + $0x200] sm:$0xff]
        %v1766 = vld [vmem:[%s1700 + $0x208] sm:$0xff]
        %v1767 = vld [vmem:[%s1700 + $0x210] sm:$0xff]
        %v1768 = vld [vmem:[%s1700 + $0x218] sm:$0xff]
        %v1769 = vld [vmem:[%s1700 + $0x220] sm:$0xff]
        %v1770 = vld [vmem:[%s1700 + $0x228] sm:$0xff]
        %v1771 = vld [vmem:[%s1700 + $0x230] sm:$0xff]
        %v1772 = vld [vmem:[%s1700 + $0x238] sm:$0xff]
        %v1773 = vld [vmem:[%s1700 + $0x240] sm:$0xff]
        %v1774 = vld [vmem:[%s1700 + $0x248] sm:$0xff]
        %v1775 = vld [vmem:[%s1700 + $0x250] sm:$0xff]
        %v1776 = vld [vmem:[%s1700 + $0x258] sm:$0xff]
        %v1777 = vld [vmem:[%s1700 + $0x260] sm:$0xff]
        %v1778 = vld [vmem:[%s1700 + $0x268] sm:$0xff]
        %v1779 = vld [vmem:[%s1700 + $0x270] sm:$0xff]
        %v1780 = vld [vmem:[%s1700 + $0x278] sm:$0xff]
        %v1781 = vld [vmem:[%s1700 + $0x280] sm:$0xff]
        %v1782 = vld [vmem:[%s1700 + $0x288] sm:$0xff]
        %v1783 = vld [vmem:[%s1700 + $0x290] sm:$0xff]
        %v1784 = vld [vmem:[%s1700 + $0x298] sm:$0xff]
        %v1785 = vld [vmem:[%s1700 + $0x2a0] sm:$0xff]
        %v1786 = vld [vmem:[%s1700 + $0x2a8] sm:$0xff]
        %v1787 = vld [vmem:[%s1700 + $0x2b0] sm:$0xff]
        %v1788 = vld [vmem:[%s1700 + $0x2b8] sm:$0xff]
        %v1789 = vld [vmem:[%s1700 + $0x2c0] sm:$0xff]
        %v1790 = vld [vmem:[%s1700 + $0x2c8] sm:$0xff]
        %v1791 = vld [vmem:[%s1700 + $0x2d0] sm:$0xff]
        %v1792 = vld [vmem:[%s1700 + $0x2d8] sm:$0xff]
        %v1793 = vld [vmem:[%s1700 + $0x2e0] sm:$0xff]
        %v1794 = vld [vmem:[%s1700 + $0x2e8] sm:$0xff]
        %v1795 = vld [vmem:[%s1700 + $0x2f0] sm:$0xff]
        %v1796 = vld [vmem:[%s1700 + $0x2f8] sm:$0xff]
        %v1797 = vld [vmem:[%s1700 + $0x300] sm:$0xff]
        %v1798 = vld [vmem:[%s1700 + $0x308] sm:$0xff]
        %v1799 = vld [vmem:[%s1700 + $0x310] sm:$0xff]
        %v1800 = vld [vmem:[%s1700 + $0x318] sm:$0xff]
        %v1801 = vld [vmem:[%s1700 + $0x320] sm:$0xff]
        %v1802 = vld [vmem:[%s1700 + $0x328] sm:$0xff]
        %v1803 = vld [vmem:[%s1700 + $0x330] sm:$0xff]
        %v1804 = vld [vmem:[%s1700 + $0x338] sm:$0xff]
        %v1805 = vld [vmem:[%s1700 + $0x340] sm:$0xff]
        %v1806 = vld [vmem:[%s1700 + $0x348] sm:$0xff]
        %v1807 = vld [vmem:[%s1700 + $0x350] sm:$0xff]
        %v1808 = vld [vmem:[%s1700 + $0x358] sm:$0xff]
        %v1809 = vld [vmem:[%s1700 + $0x360] sm:$0xff]
        %v1810 = vld [vmem:[%s1700 + $0x368] sm:$0xff]
        %v1811 = vld [vmem:[%s1700 + $0x370] sm:$0xff]
        %v1812 = vld [vmem:[%s1700 + $0x378] sm:$0xff]
        %v1813 = vld [vmem:[%s1700 + $0x380] sm:$0xff]
        %v1814 = vld [vmem:[%s1700 + $0x388] sm:$0xff]
        %v1815 = vld [vmem:[%s1700 + $0x390] sm:$0xff]
        %v1816 = vld [vmem:[%s1700 + $0x398] sm:$0xff]
        %v1817 = vld [vmem:[%s1700 + $0x3a0] sm:$0xff]
        %v1818 = vld [vmem:[%s1700 + $0x3a8] sm:$0xff]
        %v1819 = vld [vmem:[%s1700 + $0x3b0] sm:$0xff]
        %v1820 = vld [vmem:[%s1700 + $0x3b8] sm:$0xff]
        %v1821 = vld [vmem:[%s1700 + $0x3c0] sm:$0xff]
        %v1822 = vld [vmem:[%s1700 + $0x3c8] sm:$0xff]
        %v1823 = vld [vmem:[%s1700 + $0x3d0] sm:$0xff]
        %v1824 = vld [vmem:[%s1700 + $0x3d8] sm:$0xff]
        %v1825 = vld [vmem:[%s1700 + $0x3e0] sm:$0xff]
        %v1826 = vld [vmem:[%s1700 + $0x3e8] sm:$0xff]
        %v1827 = vld [vmem:[%s1700 + $0x3f0] sm:$0xff]
        %v1828 = vld [vmem:[%s1700 + $0x3f8] sm:$0xff]
        %1829 = vmatpush.msra.mxu0 %v1731
        %1830 = vmatpush.msra.mxu0 %v1729
        %1831 = vmatpush.msra.mxu0 %v1727
        %1832 = vmatpush.msra.mxu0 %v1725
        %1833 = vmatpush.msra.mxu0 %v1723
        %1834 = vmatpush.msra.mxu0 %v1721
        %1835 = vmatpush.msra.mxu0 %v1719
        %1836 = vmatpush.msra.mxu0 %v1717
        %1837 = vmatpush.msra.mxu0 %v1715
        %1838 = vmatpush.msra.mxu0 %v1713
        %1839 = vmatpush.msra.mxu0 %v1711
        %1840 = vmatpush.msra.mxu0 %v1709
        %1841 = vmatpush.msra.mxu0 %v1707
        %1842 = vmatpush.msra.mxu0 %v1705
        %1843 = vmatpush.msra.mxu0 %v1703
        %1844 = vmatpush.msra.mxu0 %v1701
        %1845 = vmatmul.f32.gmra.mxu0 %v202
        %v1846 = vpop.f32.mrf.mxu0
        %v1847 = vadd.f32 0.0, %v1846
        %1848 = vdwg.mxu0
        %1849 = vmatpush.msra.mxu0 %v1763
        %1850 = vmatpush.msra.mxu0 %v1761
        %1851 = vmatpush.msra.mxu0 %v1759
        %1852 = vmatpush.msra.mxu0 %v1757
        %1853 = vmatpush.msra.mxu0 %v1755
        %1854 = vmatpush.msra.mxu0 %v1753
        %1855 = vmatpush.msra.mxu0 %v1751
        %1856 = vmatpush.msra.mxu0 %v1749
        %1857 = vmatpush.msra.mxu0 %v1747
        %1858 = vmatpush.msra.mxu0 %v1745
        %1859 = vmatpush.msra.mxu0 %v1743
        %1860 = vmatpush.msra.mxu0 %v1741
        %1861 = vmatpush.msra.mxu0 %v1739
        %1862 = vmatpush.msra.mxu0 %v1737
        %1863 = vmatpush.msra.mxu0 %v1735
        %1864 = vmatpush.msra.mxu0 %v1733
        %1865 = vmatmul.f32.gmra.mxu0 %v203
        %v1866 = vpop.f32.mrf.mxu0
        %v1867 = vadd.f32 %v1847, %v1866
        %1868 = vdwg.mxu0
        %1869 = vmatpush.msra.mxu0 %v1795
        %1870 = vmatpush.msra.mxu0 %v1793
        %1871 = vmatpush.msra.mxu0 %v1791
        %1872 = vmatpush.msra.mxu0 %v1789
        %1873 = vmatpush.msra.mxu0 %v1787
        %1874 = vmatpush.msra.mxu0 %v1785
        %1875 = vmatpush.msra.mxu0 %v1783
        %1876 = vmatpush.msra.mxu0 %v1781
        %1877 = vmatpush.msra.mxu0 %v1779
        %1878 = vmatpush.msra.mxu0 %v1777
        %1879 = vmatpush.msra.mxu0 %v1775
        %1880 = vmatpush.msra.mxu0 %v1773
        %1881 = vmatpush.msra.mxu0 %v1771
        %1882 = vmatpush.msra.mxu0 %v1769
        %1883 = vmatpush.msra.mxu0 %v1767
        %1884 = vmatpush.msra.mxu0 %v1765
        %1885 = vmatmul.f32.gmra.mxu0 %v206
        %v1886 = vpop.f32.mrf.mxu0
        %v1887 = vadd.f32 %v1867, %v1886
        %1888 = vdwg.mxu0
        %1889 = vmatpush.msra.mxu0 %v1827
        %1890 = vmatpush.msra.mxu0 %v1825
        %1891 = vmatpush.msra.mxu0 %v1823
        %1892 = vmatpush.msra.mxu0 %v1821
        %1893 = vmatpush.msra.mxu0 %v1819
        %1894 = vmatpush.msra.mxu0 %v1817
        %1895 = vmatpush.msra.mxu0 %v1815
        %1896 = vmatpush.msra.mxu0 %v1813
        %1897 = vmatpush.msra.mxu0 %v1811
        %1898 = vmatpush.msra.mxu0 %v1809
        %1899 = vmatpush.msra.mxu0 %v1807
        %1900 = vmatpush.msra.mxu0 %v1805
        %1901 = vmatpush.msra.mxu0 %v1803
        %1902 = vmatpush.msra.mxu0 %v1801
        %1903 = vmatpush.msra.mxu0 %v1799
        %1904 = vmatpush.msra.mxu0 %v1797
        %1905 = vmatmul.f32.gmra.mxu0 %v209
        %v1906 = vpop.f32.mrf.mxu0
        %v1907 = vadd.f32 %v1887, %v1906
        %1908 = vdwg.mxu0
        %1909 = vmatpush.msra.mxu0 %v1732
        %1910 = vmatpush.msra.mxu0 %v1730
        %1911 = vmatpush.msra.mxu0 %v1728
        %1912 = vmatpush.msra.mxu0 %v1726
        %1913 = vmatpush.msra.mxu0 %v1724
        %1914 = vmatpush.msra.mxu0 %v1722
        %1915 = vmatpush.msra.mxu0 %v1720
        %1916 = vmatpush.msra.mxu0 %v1718
        %1917 = vmatpush.msra.mxu0 %v1716
        %1918 = vmatpush.msra.mxu0 %v1714
        %1919 = vmatpush.msra.mxu0 %v1712
        %1920 = vmatpush.msra.mxu0 %v1710
        %1921 = vmatpush.msra.mxu0 %v1708
        %1922 = vmatpush.msra.mxu0 %v1706
        %1923 = vmatpush.msra.mxu0 %v1704
        %1924 = vmatpush.msra.mxu0 %v1702
        %1925 = vmatmul.f32.gmra.mxu0 %v202
        %v1926 = vpop.f32.mrf.mxu0
        %v1927 = vadd.f32 0.0, %v1926
        %1928 = vdwg.mxu0
        %1929 = vmatpush.msra.mxu0 %v1764
        %1930 = vmatpush.msra.mxu0 %v1762
        %1931 = vmatpush.msra.mxu0 %v1760
        %1932 = vmatpush.msra.mxu0 %v1758
        %1933 = vmatpush.msra.mxu0 %v1756
        %1934 = vmatpush.msra.mxu0 %v1754
        %1935 = vmatpush.msra.mxu0 %v1752
        %1936 = vmatpush.msra.mxu0 %v1750
        %1937 = vmatpush.msra.mxu0 %v1748
        %1938 = vmatpush.msra.mxu0 %v1746
        %1939 = vmatpush.msra.mxu0 %v1744
        %1940 = vmatpush.msra.mxu0 %v1742
        %1941 = vmatpush.msra.mxu0 %v1740
        %1942 = vmatpush.msra.mxu0 %v1738
        %1943 = vmatpush.msra.mxu0 %v1736
        %1944 = vmatpush.msra.mxu0 %v1734
        %1945 = vmatmul.f32.gmra.mxu0 %v203
        %v1946 = vpop.f32.mrf.mxu0
        %v1947 = vadd.f32 %v1927, %v1946
        %1948 = vdwg.mxu0
        %1949 = vmatpush.msra.mxu0 %v1796
        %1950 = vmatpush.msra.mxu0 %v1794
        %1951 = vmatpush.msra.mxu0 %v1792
        %1952 = vmatpush.msra.mxu0 %v1790
        %1953 = vmatpush.msra.mxu0 %v1788
        %1954 = vmatpush.msra.mxu0 %v1786
        %1955 = vmatpush.msra.mxu0 %v1784
        %1956 = vmatpush.msra.mxu0 %v1782
        %1957 = vmatpush.msra.mxu0 %v1780
        %1958 = vmatpush.msra.mxu0 %v1778
        %1959 = vmatpush.msra.mxu0 %v1776
        %1960 = vmatpush.msra.mxu0 %v1774
        %1961 = vmatpush.msra.mxu0 %v1772
        %1962 = vmatpush.msra.mxu0 %v1770
        %1963 = vmatpush.msra.mxu0 %v1768
        %1964 = vmatpush.msra.mxu0 %v1766
        %1965 = vmatmul.f32.gmra.mxu0 %v206
        %v1966 = vpop.f32.mrf.mxu0
        %v1967 = vadd.f32 %v1947, %v1966
        %1968 = vdwg.mxu0
        %1969 = vmatpush.msra.mxu0 %v1828
        %1970 = vmatpush.msra.mxu0 %v1826
        %1971 = vmatpush.msra.mxu0 %v1824
        %1972 = vmatpush.msra.mxu0 %v1822
        %1973 = vmatpush.msra.mxu0 %v1820
        %1974 = vmatpush.msra.mxu0 %v1818
        %1975 = vmatpush.msra.mxu0 %v1816
        %1976 = vmatpush.msra.mxu0 %v1814
        %1977 = vmatpush.msra.mxu0 %v1812
        %1978 = vmatpush.msra.mxu0 %v1810
        %1979 = vmatpush.msra.mxu0 %v1808
        %1980 = vmatpush.msra.mxu0 %v1806
        %1981 = vmatpush.msra.mxu0 %v1804
        %1982 = vmatpush.msra.mxu0 %v1802
        %1983 = vmatpush.msra.mxu0 %v1800
        %1984 = vmatpush.msra.mxu0 %v1798
        %1985 = vmatmul.f32.gmra.mxu0 %v209
        %v1986 = vpop.f32.mrf.mxu0
        %v1987 = vadd.f32 %v1967, %v1986
        %1988 = vdwg.mxu0
        %v1991 = vrot.slane %v1907, 2
        %v1992 = vrot.slane %v1987, 2
        %vm1995 = vcmask 1045504
        %v1996 = vsel %vm1995, %v1991, 0.0
        %v1997 = vsel %vm1995, %v1992, 0.0
        %v1998 = vadd.f32 %v1698, %v1996
        %v1999 = vadd.f32 %v1699, %v1997
        %s2000 = scalar_lea.vmem [#allocation2], 6144
        %v2001 = vld [vmem:[%s2000] sm:$0xff]
        %v2002 = vld [vmem:[%s2000 + $0x8] sm:$0xff]
        %v2003 = vld [vmem:[%s2000 + $0x10] sm:$0xff]
        %v2004 = vld [vmem:[%s2000 + $0x18] sm:$0xff]
        %v2005 = vld [vmem:[%s2000 + $0x20] sm:$0xff]
        %v2006 = vld [vmem:[%s2000 + $0x28] sm:$0xff]
        %v2007 = vld [vmem:[%s2000 + $0x30] sm:$0xff]
        %v2008 = vld [vmem:[%s2000 + $0x38] sm:$0xff]
        %v2009 = vld [vmem:[%s2000 + $0x40] sm:$0xff]
        %v2010 = vld [vmem:[%s2000 + $0x48] sm:$0xff]
        %v2011 = vld [vmem:[%s2000 + $0x50] sm:$0xff]
        %v2012 = vld [vmem:[%s2000 + $0x58] sm:$0xff]
        %v2013 = vld [vmem:[%s2000 + $0x60] sm:$0xff]
        %v2014 = vld [vmem:[%s2000 + $0x68] sm:$0xff]
        %v2015 = vld [vmem:[%s2000 + $0x70] sm:$0xff]
        %v2016 = vld [vmem:[%s2000 + $0x78] sm:$0xff]
        %v2017 = vld [vmem:[%s2000 + $0x80] sm:$0xff]
        %v2018 = vld [vmem:[%s2000 + $0x88] sm:$0xff]
        %v2019 = vld [vmem:[%s2000 + $0x90] sm:$0xff]
        %v2020 = vld [vmem:[%s2000 + $0x98] sm:$0xff]
        %v2021 = vld [vmem:[%s2000 + $0xa0] sm:$0xff]
        %v2022 = vld [vmem:[%s2000 + $0xa8] sm:$0xff]
        %v2023 = vld [vmem:[%s2000 + $0xb0] sm:$0xff]
        %v2024 = vld [vmem:[%s2000 + $0xb8] sm:$0xff]
        %v2025 = vld [vmem:[%s2000 + $0xc0] sm:$0xff]
        %v2026 = vld [vmem:[%s2000 + $0xc8] sm:$0xff]
        %v2027 = vld [vmem:[%s2000 + $0xd0] sm:$0xff]
        %v2028 = vld [vmem:[%s2000 + $0xd8] sm:$0xff]
        %v2029 = vld [vmem:[%s2000 + $0xe0] sm:$0xff]
        %v2030 = vld [vmem:[%s2000 + $0xe8] sm:$0xff]
        %v2031 = vld [vmem:[%s2000 + $0xf0] sm:$0xff]
        %v2032 = vld [vmem:[%s2000 + $0xf8] sm:$0xff]
        %v2033 = vld [vmem:[%s2000 + $0x100] sm:$0xff]
        %v2034 = vld [vmem:[%s2000 + $0x108] sm:$0xff]
        %v2035 = vld [vmem:[%s2000 + $0x110] sm:$0xff]
        %v2036 = vld [vmem:[%s2000 + $0x118] sm:$0xff]
        %v2037 = vld [vmem:[%s2000 + $0x120] sm:$0xff]
        %v2038 = vld [vmem:[%s2000 + $0x128] sm:$0xff]
        %v2039 = vld [vmem:[%s2000 + $0x130] sm:$0xff]
        %v2040 = vld [vmem:[%s2000 + $0x138] sm:$0xff]
        %v2041 = vld [vmem:[%s2000 + $0x140] sm:$0xff]
        %v2042 = vld [vmem:[%s2000 + $0x148] sm:$0xff]
        %v2043 = vld [vmem:[%s2000 + $0x150] sm:$0xff]
        %v2044 = vld [vmem:[%s2000 + $0x158] sm:$0xff]
        %v2045 = vld [vmem:[%s2000 + $0x160] sm:$0xff]
        %v2046 = vld [vmem:[%s2000 + $0x168] sm:$0xff]
        %v2047 = vld [vmem:[%s2000 + $0x170] sm:$0xff]
        %v2048 = vld [vmem:[%s2000 + $0x178] sm:$0xff]
        %v2049 = vld [vmem:[%s2000 + $0x180] sm:$0xff]
        %v2050 = vld [vmem:[%s2000 + $0x188] sm:$0xff]
        %v2051 = vld [vmem:[%s2000 + $0x190] sm:$0xff]
        %v2052 = vld [vmem:[%s2000 + $0x198] sm:$0xff]
        %v2053 = vld [vmem:[%s2000 + $0x1a0] sm:$0xff]
        %v2054 = vld [vmem:[%s2000 + $0x1a8] sm:$0xff]
        %v2055 = vld [vmem:[%s2000 + $0x1b0] sm:$0xff]
        %v2056 = vld [vmem:[%s2000 + $0x1b8] sm:$0xff]
        %v2057 = vld [vmem:[%s2000 + $0x1c0] sm:$0xff]
        %v2058 = vld [vmem:[%s2000 + $0x1c8] sm:$0xff]
        %v2059 = vld [vmem:[%s2000 + $0x1d0] sm:$0xff]
        %v2060 = vld [vmem:[%s2000 + $0x1d8] sm:$0xff]
        %v2061 = vld [vmem:[%s2000 + $0x1e0] sm:$0xff]
        %v2062 = vld [vmem:[%s2000 + $0x1e8] sm:$0xff]
        %v2063 = vld [vmem:[%s2000 + $0x1f0] sm:$0xff]
        %v2064 = vld [vmem:[%s2000 + $0x1f8] sm:$0xff]
        %v2065 = vld [vmem:[%s2000 + $0x200] sm:$0xff]
        %v2066 = vld [vmem:[%s2000 + $0x208] sm:$0xff]
        %v2067 = vld [vmem:[%s2000 + $0x210] sm:$0xff]
        %v2068 = vld [vmem:[%s2000 + $0x218] sm:$0xff]
        %v2069 = vld [vmem:[%s2000 + $0x220] sm:$0xff]
        %v2070 = vld [vmem:[%s2000 + $0x228] sm:$0xff]
        %v2071 = vld [vmem:[%s2000 + $0x230] sm:$0xff]
        %v2072 = vld [vmem:[%s2000 + $0x238] sm:$0xff]
        %v2073 = vld [vmem:[%s2000 + $0x240] sm:$0xff]
        %v2074 = vld [vmem:[%s2000 + $0x248] sm:$0xff]
        %v2075 = vld [vmem:[%s2000 + $0x250] sm:$0xff]
        %v2076 = vld [vmem:[%s2000 + $0x258] sm:$0xff]
        %v2077 = vld [vmem:[%s2000 + $0x260] sm:$0xff]
        %v2078 = vld [vmem:[%s2000 + $0x268] sm:$0xff]
        %v2079 = vld [vmem:[%s2000 + $0x270] sm:$0xff]
        %v2080 = vld [vmem:[%s2000 + $0x278] sm:$0xff]
        %v2081 = vld [vmem:[%s2000 + $0x280] sm:$0xff]
        %v2082 = vld [vmem:[%s2000 + $0x288] sm:$0xff]
        %v2083 = vld [vmem:[%s2000 + $0x290] sm:$0xff]
        %v2084 = vld [vmem:[%s2000 + $0x298] sm:$0xff]
        %v2085 = vld [vmem:[%s2000 + $0x2a0] sm:$0xff]
        %v2086 = vld [vmem:[%s2000 + $0x2a8] sm:$0xff]
        %v2087 = vld [vmem:[%s2000 + $0x2b0] sm:$0xff]
        %v2088 = vld [vmem:[%s2000 + $0x2b8] sm:$0xff]
        %v2089 = vld [vmem:[%s2000 + $0x2c0] sm:$0xff]
        %v2090 = vld [vmem:[%s2000 + $0x2c8] sm:$0xff]
        %v2091 = vld [vmem:[%s2000 + $0x2d0] sm:$0xff]
        %v2092 = vld [vmem:[%s2000 + $0x2d8] sm:$0xff]
        %v2093 = vld [vmem:[%s2000 + $0x2e0] sm:$0xff]
        %v2094 = vld [vmem:[%s2000 + $0x2e8] sm:$0xff]
        %v2095 = vld [vmem:[%s2000 + $0x2f0] sm:$0xff]
        %v2096 = vld [vmem:[%s2000 + $0x2f8] sm:$0xff]
        %v2097 = vld [vmem:[%s2000 + $0x300] sm:$0xff]
        %v2098 = vld [vmem:[%s2000 + $0x308] sm:$0xff]
        %v2099 = vld [vmem:[%s2000 + $0x310] sm:$0xff]
        %v2100 = vld [vmem:[%s2000 + $0x318] sm:$0xff]
        %v2101 = vld [vmem:[%s2000 + $0x320] sm:$0xff]
        %v2102 = vld [vmem:[%s2000 + $0x328] sm:$0xff]
        %v2103 = vld [vmem:[%s2000 + $0x330] sm:$0xff]
        %v2104 = vld [vmem:[%s2000 + $0x338] sm:$0xff]
        %v2105 = vld [vmem:[%s2000 + $0x340] sm:$0xff]
        %v2106 = vld [vmem:[%s2000 + $0x348] sm:$0xff]
        %v2107 = vld [vmem:[%s2000 + $0x350] sm:$0xff]
        %v2108 = vld [vmem:[%s2000 + $0x358] sm:$0xff]
        %v2109 = vld [vmem:[%s2000 + $0x360] sm:$0xff]
        %v2110 = vld [vmem:[%s2000 + $0x368] sm:$0xff]
        %v2111 = vld [vmem:[%s2000 + $0x370] sm:$0xff]
        %v2112 = vld [vmem:[%s2000 + $0x378] sm:$0xff]
        %v2113 = vld [vmem:[%s2000 + $0x380] sm:$0xff]
        %v2114 = vld [vmem:[%s2000 + $0x388] sm:$0xff]
        %v2115 = vld [vmem:[%s2000 + $0x390] sm:$0xff]
        %v2116 = vld [vmem:[%s2000 + $0x398] sm:$0xff]
        %v2117 = vld [vmem:[%s2000 + $0x3a0] sm:$0xff]
        %v2118 = vld [vmem:[%s2000 + $0x3a8] sm:$0xff]
        %v2119 = vld [vmem:[%s2000 + $0x3b0] sm:$0xff]
        %v2120 = vld [vmem:[%s2000 + $0x3b8] sm:$0xff]
        %v2121 = vld [vmem:[%s2000 + $0x3c0] sm:$0xff]
        %v2122 = vld [vmem:[%s2000 + $0x3c8] sm:$0xff]
        %v2123 = vld [vmem:[%s2000 + $0x3d0] sm:$0xff]
        %v2124 = vld [vmem:[%s2000 + $0x3d8] sm:$0xff]
        %v2125 = vld [vmem:[%s2000 + $0x3e0] sm:$0xff]
        %v2126 = vld [vmem:[%s2000 + $0x3e8] sm:$0xff]
        %v2127 = vld [vmem:[%s2000 + $0x3f0] sm:$0xff]
        %v2128 = vld [vmem:[%s2000 + $0x3f8] sm:$0xff]
        %2129 = vmatpush.msra.mxu0 %v2031
        %2130 = vmatpush.msra.mxu0 %v2029
        %2131 = vmatpush.msra.mxu0 %v2027
        %2132 = vmatpush.msra.mxu0 %v2025
        %2133 = vmatpush.msra.mxu0 %v2023
        %2134 = vmatpush.msra.mxu0 %v2021
        %2135 = vmatpush.msra.mxu0 %v2019
        %2136 = vmatpush.msra.mxu0 %v2017
        %2137 = vmatpush.msra.mxu0 %v2015
        %2138 = vmatpush.msra.mxu0 %v2013
        %2139 = vmatpush.msra.mxu0 %v2011
        %2140 = vmatpush.msra.mxu0 %v2009
        %2141 = vmatpush.msra.mxu0 %v2007
        %2142 = vmatpush.msra.mxu0 %v2005
        %2143 = vmatpush.msra.mxu0 %v2003
        %2144 = vmatpush.msra.mxu0 %v2001
        %2145 = vmatmul.f32.gmra.mxu0 %v202
        %v2146 = vpop.f32.mrf.mxu0
        %v2147 = vadd.f32 0.0, %v2146
        %2148 = vdwg.mxu0
        %2149 = vmatpush.msra.mxu0 %v2063
        %2150 = vmatpush.msra.mxu0 %v2061
        %2151 = vmatpush.msra.mxu0 %v2059
        %2152 = vmatpush.msra.mxu0 %v2057
        %2153 = vmatpush.msra.mxu0 %v2055
        %2154 = vmatpush.msra.mxu0 %v2053
        %2155 = vmatpush.msra.mxu0 %v2051
        %2156 = vmatpush.msra.mxu0 %v2049
        %2157 = vmatpush.msra.mxu0 %v2047
        %2158 = vmatpush.msra.mxu0 %v2045
        %2159 = vmatpush.msra.mxu0 %v2043
        %2160 = vmatpush.msra.mxu0 %v2041
        %2161 = vmatpush.msra.mxu0 %v2039
        %2162 = vmatpush.msra.mxu0 %v2037
        %2163 = vmatpush.msra.mxu0 %v2035
        %2164 = vmatpush.msra.mxu0 %v2033
        %2165 = vmatmul.f32.gmra.mxu0 %v203
        %v2166 = vpop.f32.mrf.mxu0
        %v2167 = vadd.f32 %v2147, %v2166
        %2168 = vdwg.mxu0
        %2169 = vmatpush.msra.mxu0 %v2095
        %2170 = vmatpush.msra.mxu0 %v2093
        %2171 = vmatpush.msra.mxu0 %v2091
        %2172 = vmatpush.msra.mxu0 %v2089
        %2173 = vmatpush.msra.mxu0 %v2087
        %2174 = vmatpush.msra.mxu0 %v2085
        %2175 = vmatpush.msra.mxu0 %v2083
        %2176 = vmatpush.msra.mxu0 %v2081
        %2177 = vmatpush.msra.mxu0 %v2079
        %2178 = vmatpush.msra.mxu0 %v2077
        %2179 = vmatpush.msra.mxu0 %v2075
        %2180 = vmatpush.msra.mxu0 %v2073
        %2181 = vmatpush.msra.mxu0 %v2071
        %2182 = vmatpush.msra.mxu0 %v2069
        %2183 = vmatpush.msra.mxu0 %v2067
        %2184 = vmatpush.msra.mxu0 %v2065
        %2185 = vmatmul.f32.gmra.mxu0 %v206
        %v2186 = vpop.f32.mrf.mxu0
        %v2187 = vadd.f32 %v2167, %v2186
        %2188 = vdwg.mxu0
        %2189 = vmatpush.msra.mxu0 %v2127
        %2190 = vmatpush.msra.mxu0 %v2125
        %2191 = vmatpush.msra.mxu0 %v2123
        %2192 = vmatpush.msra.mxu0 %v2121
        %2193 = vmatpush.msra.mxu0 %v2119
        %2194 = vmatpush.msra.mxu0 %v2117
        %2195 = vmatpush.msra.mxu0 %v2115
        %2196 = vmatpush.msra.mxu0 %v2113
        %2197 = vmatpush.msra.mxu0 %v2111
        %2198 = vmatpush.msra.mxu0 %v2109
        %2199 = vmatpush.msra.mxu0 %v2107
        %2200 = vmatpush.msra.mxu0 %v2105
        %2201 = vmatpush.msra.mxu0 %v2103
        %2202 = vmatpush.msra.mxu0 %v2101
        %2203 = vmatpush.msra.mxu0 %v2099
        %2204 = vmatpush.msra.mxu0 %v2097
        %2205 = vmatmul.f32.gmra.mxu0 %v209
        %v2206 = vpop.f32.mrf.mxu0
        %v2207 = vadd.f32 %v2187, %v2206
        %2208 = vdwg.mxu0
        %2209 = vmatpush.msra.mxu0 %v2032
        %2210 = vmatpush.msra.mxu0 %v2030
        %2211 = vmatpush.msra.mxu0 %v2028
        %2212 = vmatpush.msra.mxu0 %v2026
        %2213 = vmatpush.msra.mxu0 %v2024
        %2214 = vmatpush.msra.mxu0 %v2022
        %2215 = vmatpush.msra.mxu0 %v2020
        %2216 = vmatpush.msra.mxu0 %v2018
        %2217 = vmatpush.msra.mxu0 %v2016
        %2218 = vmatpush.msra.mxu0 %v2014
        %2219 = vmatpush.msra.mxu0 %v2012
        %2220 = vmatpush.msra.mxu0 %v2010
        %2221 = vmatpush.msra.mxu0 %v2008
        %2222 = vmatpush.msra.mxu0 %v2006
        %2223 = vmatpush.msra.mxu0 %v2004
        %2224 = vmatpush.msra.mxu0 %v2002
        %2225 = vmatmul.f32.gmra.mxu0 %v202
        %v2226 = vpop.f32.mrf.mxu0
        %v2227 = vadd.f32 0.0, %v2226
        %2228 = vdwg.mxu0
        %2229 = vmatpush.msra.mxu0 %v2064
        %2230 = vmatpush.msra.mxu0 %v2062
        %2231 = vmatpush.msra.mxu0 %v2060
        %2232 = vmatpush.msra.mxu0 %v2058
        %2233 = vmatpush.msra.mxu0 %v2056
        %2234 = vmatpush.msra.mxu0 %v2054
        %2235 = vmatpush.msra.mxu0 %v2052
        %2236 = vmatpush.msra.mxu0 %v2050
        %2237 = vmatpush.msra.mxu0 %v2048
        %2238 = vmatpush.msra.mxu0 %v2046
        %2239 = vmatpush.msra.mxu0 %v2044
        %2240 = vmatpush.msra.mxu0 %v2042
        %2241 = vmatpush.msra.mxu0 %v2040
        %2242 = vmatpush.msra.mxu0 %v2038
        %2243 = vmatpush.msra.mxu0 %v2036
        %2244 = vmatpush.msra.mxu0 %v2034
        %2245 = vmatmul.f32.gmra.mxu0 %v203
        %v2246 = vpop.f32.mrf.mxu0
        %v2247 = vadd.f32 %v2227, %v2246
        %2248 = vdwg.mxu0
        %2249 = vmatpush.msra.mxu0 %v2096
        %2250 = vmatpush.msra.mxu0 %v2094
        %2251 = vmatpush.msra.mxu0 %v2092
        %2252 = vmatpush.msra.mxu0 %v2090
        %2253 = vmatpush.msra.mxu0 %v2088
        %2254 = vmatpush.msra.mxu0 %v2086
        %2255 = vmatpush.msra.mxu0 %v2084
        %2256 = vmatpush.msra.mxu0 %v2082
        %2257 = vmatpush.msra.mxu0 %v2080
        %2258 = vmatpush.msra.mxu0 %v2078
        %2259 = vmatpush.msra.mxu0 %v2076
        %2260 = vmatpush.msra.mxu0 %v2074
        %2261 = vmatpush.msra.mxu0 %v2072
        %2262 = vmatpush.msra.mxu0 %v2070
        %2263 = vmatpush.msra.mxu0 %v2068
        %2264 = vmatpush.msra.mxu0 %v2066
        %2265 = vmatmul.f32.gmra.mxu0 %v206
        %v2266 = vpop.f32.mrf.mxu0
        %v2267 = vadd.f32 %v2247, %v2266
        %2268 = vdwg.mxu0
        %2269 = vmatpush.msra.mxu0 %v2128
        %2270 = vmatpush.msra.mxu0 %v2126
        %2271 = vmatpush.msra.mxu0 %v2124
        %2272 = vmatpush.msra.mxu0 %v2122
        %2273 = vmatpush.msra.mxu0 %v2120
        %2274 = vmatpush.msra.mxu0 %v2118
        %2275 = vmatpush.msra.mxu0 %v2116
        %2276 = vmatpush.msra.mxu0 %v2114
        %2277 = vmatpush.msra.mxu0 %v2112
        %2278 = vmatpush.msra.mxu0 %v2110
        %2279 = vmatpush.msra.mxu0 %v2108
        %2280 = vmatpush.msra.mxu0 %v2106
        %2281 = vmatpush.msra.mxu0 %v2104
        %2282 = vmatpush.msra.mxu0 %v2102
        %2283 = vmatpush.msra.mxu0 %v2100
        %2284 = vmatpush.msra.mxu0 %v2098
        %2285 = vmatmul.f32.gmra.mxu0 %v209
        %v2286 = vpop.f32.mrf.mxu0
        %v2287 = vadd.f32 %v2267, %v2286
        %2288 = vdwg.mxu0
        %v2291 = vrot.slane %v2207, 3
        %v2292 = vrot.slane %v2287, 3
        %vm2295 = vcmask 1044480
        %v2296 = vsel %vm2295, %v2291, 0.0
        %v2297 = vsel %vm2295, %v2292, 0.0
        %v2298 = vadd.f32 %v1998, %v2296
        %v2299 = vadd.f32 %v1999, %v2297
        %v2300 = vxor.u32 %v2298, 2147483648
        %v2301 = vxor.u32 %v2299, 2147483648
        %v2302 = vmul.f32 %v2300, 1.442695
        %v2303 = vpow.pop %v2302
        %v2304 = vmul.f32 %v2301, 1.442695
        %v2305 = vpow.pop %v2304
        %v2306 = vadd.f32 %v2303, 1.0
        %v2307 = vadd.f32 %v2305, 1.0
        %v2308 = vrcp.pop %v2306
        %v2309 = vmul.f32 %v2306, %v2308
        %v2310 = vsub.f32 1.0, %v2309
        %v2311 = vmul.f32 %v2308, %v2310
        %v2312 = vadd.f32 %v2308, %v2311
        %vm2313 = vweird.f32 %v2306
        %vm2314 = vweird.f32 %v2308
        %vm2315 = vmor %vm2313, %vm2314
        %v2316 = vsel %vm2315, %v2308, %v2312
        %v2317 = vand.u32 2147483647, %v2306
        %vm2318 = vcmp.eq.f32.partialorder %v2317, 8.507059e+37
        %v2319 = vand.u32 %v2306, 2147483648
        %v2320 = vor.u32 1.1754944e-38, %v2319
        %v2321 = vsel %vm2318, %v2320, %v2316
        %v2322 = vmul.f32 1.0, %v2321
        %v2323 = vrcp.pop %v2307
        %v2324 = vmul.f32 %v2307, %v2323
        %v2325 = vsub.f32 1.0, %v2324
        %v2326 = vmul.f32 %v2323, %v2325
        %v2327 = vadd.f32 %v2323, %v2326
        %vm2328 = vweird.f32 %v2307
        %vm2329 = vweird.f32 %v2323
        %vm2330 = vmor %vm2328, %vm2329
        %v2331 = vsel %vm2330, %v2323, %v2327
        %v2332 = vand.u32 2147483647, %v2307
        %vm2333 = vcmp.eq.f32.partialorder %v2332, 8.507059e+37
        %v2334 = vand.u32 %v2307, 2147483648
        %v2335 = vor.u32 1.1754944e-38, %v2334
        %v2336 = vsel %vm2333, %v2335, %v2331
        %v2337 = vmul.f32 1.0, %v2336
        %v2338 = vmul.f32 %v181, %v2322
        %v2339 = vmul.f32 %v182, %v2337
        %v2340 = vmul.f32 %v183, %v2322
        %v2341 = vmul.f32 %v184, %v2337
        %v2342 = vmul.f32 %v185, %v2322
        %v2343 = vmul.f32 %v186, %v2337
        %v2344 = vmul.f32 %v187, %v2322
        %v2345 = vmul.f32 %v188, %v2337
        %2346 = vst [vmem:[%s180] sm:$0xff] %v2338
        %2347 = vst [vmem:[%s180 + $0x8] sm:$0xff] %v2339
        %2348 = vst [vmem:[%s180 + $0x10] sm:$0xff] %v2340
        %2349 = vst [vmem:[%s180 + $0x18] sm:$0xff] %v2341
        %2350 = vst [vmem:[%s180 + $0x20] sm:$0xff] %v2342
        %2351 = vst [vmem:[%s180 + $0x28] sm:$0xff] %v2343
        %2352 = vst [vmem:[%s180 + $0x30] sm:$0xff] %v2344
        %2353 = vst [vmem:[%s180 + $0x38] sm:$0xff] %v2345
        %s2354 = sand.u32 %s75, 1
        %s2355 = scalar_lea.sflag [#allocation4], %s2354
        %s2356 = sand.u32 %s75, 1
        %s2357 = smul.addr %s2356, 64
        %s2358 = scalar_lea.vmem [#allocation7], %s2357
        // Predicated region
        $region37: #{tpu_custom_call.1} parent=27 // pred_check
          %p2359 = pneg %p85
        $region38: #{tpu_custom_call.1} parent=27 // pred_check_branch
          %2361 = sbr.rel (%p2359) target = $region40
        $region39: #{tpu_custom_call.1} parent=27 // pred_region
          %2363 = vsyncadd %s2355, 0
          %s2364 = smul.addr %s20, 8
          %s2365 = smul.addr %s2364, 8
          %s2366 = scalar_lea.hbm %s2, %s2365
          %s2367 = sshll.u32 %s2358, 4
          %s2368 = int_to_ptr.vmem [resolvable:$true] %s2367
          %s2369 = sshll.u32 %s2366, 4
          %s2370 = int_to_ptr.hbm [resolvable:$true] %s2369
          %2375 = dma.vmem_to_hbm [thread:$0]  %s2368, 1024, %s2370, %s2355, 256, 256, 16
        $region40: #{tpu_custom_call.1} parent=27 // pred_fallthru
          _
      $region28: #{tpu_custom_call.1} parent=5 // pred_fallthru
        _
      %p2376 = scmp.le.s32.totalorder 2, %s15
      // Predicated region
      $region41: #{tpu_custom_call.1} parent=5 // pred_check
        %p2377 = pneg %p2376
      $region42: #{tpu_custom_call.1} parent=5 // pred_check_branch
        %2379 = sbr.rel (%p2377) target = $region44
      $region43: #{tpu_custom_call.1} parent=5 // pred_region
        %s2380 = ssub.s32 %s15, 2
        // Predicated region
        $region45: #{tpu_custom_call.1} parent=43 // pred_check
          %p2381 = pneg %p91
        $region46: #{tpu_custom_call.1} parent=43 // pred_check_branch
          %2383 = sbr.rel (%p2381) target = $region48
        $region47: #{tpu_custom_call.1} parent=43 // pred_region
          %s2384 = sand.u32 %s76, 1
          %s2385 = scalar_lea.sflag [#allocation4], %s2384
          %s2386 = sand.u32 %s76, 1
          %s2387 = smul.addr %s2386, 64
          %s2388 = scalar_lea.vmem [#allocation7], %s2387
          %2390 = dma.done %s2385, 1024
        $region48: #{tpu_custom_call.1} parent=43 // pred_fallthru
          _
      $region44: #{tpu_custom_call.1} parent=5 // pred_fallthru
        _
    $region6: #{tpu_custom_call.1} parent=1 // loop_footer
      %s19 = sadd.s32 1, %s15
    $region7: #{tpu_custom_call.1} parent=1 // loop_footer_branch
      %14 = sbr.rel target = $region3
    $region8: #{tpu_custom_call.1} parent=1 // loop_exit
      _
    %2391 = vsyncpa [#allocation3], 1
    %s2392 = scalar_lea.sflag [#allocation3], 1
    %2393 = vsyncpa %s2392, 1
    %2394 = vsyncpa [#allocation6], 1
    %s2395 = scalar_lea.sflag [#allocation6], 1
    %2396 = vsyncpa %s2395, 1
    %2397 = vsyncpa [#allocation4], 1
    %s2398 = scalar_lea.sflag [#allocation4], 1
    %2399 = vsyncpa %s2398, 1

</llo_original>
